<compile_context>
chip_gen: v5e
topology: v5e:2x2
jax: 0.10.0
libtpu: 0.0.40
codegen_flags: <defaults>
</compile_context>

<pallas_src>
import numpy as np
import jax
import jax.numpy as jnp
from jax import lax
from jax.experimental import pallas as pl
from jax.experimental.pallas import tpu as pltpu

LANES = 128
SUBLANES = 8
TM_INIT = 1024           # row tile for init-time reduction passes (512 KiB / block)
TM_FWD = 2048            # row tile for the HBM-bound fake-quant pass (1 MiB / block)
N_CORES = 2              # leading "parallel" grid axis: 2 TCs on v7x, harmless elsewhere
N_CAND = 80              # MSE search candidates per (mode, bit)
N_BIT_SLOTS = 7          # bits 2..8
N_MODES = 2              # 0 = symmetric, 1 = asymmetric
K_TOTAL = N_MODES * N_BIT_SLOTS * N_CAND   # 1120 (multiple of 8)
VMEM_LIMIT = 16 * 1024 * 1024


# --------------------------------------------------------------------------
# Host-side helpers
# --------------------------------------------------------------------------

def _round_up(a, b):
    return ((a + b - 1) // b) * b


def _init_tiling(numel):
    """Row tiling for the init passes: rows_total = N_CORES * steps * tile_rows,
    keeping the neutral-value padding small."""
    rows = -(-numel // LANES)
    rows8 = _round_up(rows, SUBLANES)
    steps = -(-rows8 // (N_CORES * TM_INIT))
    tile_rows = min(TM_INIT, _round_up(-(-rows8 // (N_CORES * steps)), SUBLANES))
    rows_total = N_CORES * steps * tile_rows
    return tile_rows, steps, rows_total


# --------------------------------------------------------------------------
# Pallas kernels
# --------------------------------------------------------------------------

def _stats_kernel(x_ref, out_ref):
    """Per-core lane-vector reductions, resident output block (8, 128):
       row 0 = running min, row 1 = running max, row 2 = running sum."""
    r = pl.program_id(1)
    x = x_ref[...]
    mn = jnp.min(x, axis=0, keepdims=True)
    mx = jnp.max(x, axis=0, keepdims=True)
    sm = jnp.sum(x, axis=0, keepdims=True)

    @pl.when(r == 0)
    def _():
        out_ref[0:1, :] = mn
        out_ref[1:2, :] = mx
        out_ref[2:3, :] = sm
        out_ref[3:8, :] = jnp.zeros((5, LANES), jnp.float32)

    @pl.when(r > 0)
    def _():
        out_ref[0:1, :] = jnp.minimum(out_ref[0:1, :], mn)
        out_ref[1:2, :] = jnp.maximum(out_ref[1:2, :], mx)
        out_ref[2:3, :] = out_ref[2:3, :] + sm


def _score_kernel(cand_ref, x_ref, acc_ref):
    """Accumulate sum(|x - dequant(quant(x))| ** 2.4) per candidate.
       cand_ref : SMEM (4, K)  rows = [delta, 1/delta, lo=-zp, hi=qmax-zp]
       x_ref    : VMEM (tile_rows, 128)
       acc_ref  : VMEM (K, 128) resident per-core lane accumulator (collapsed on host)."""
    r = pl.program_id(1)

    @pl.when(r == 0)
    def _():
        acc_ref[...] = jnp.zeros(acc_ref.shape, jnp.float32)

    x = x_ref[...]
    n_groups = acc_ref.shape[0] // SUBLANES

    def group_body(g, carry):
        base = pl.multiple_of(g * SUBLANES, SUBLANES)
        rows = []
        for j in range(SUBLANES):                      # static 8-wide unroll
            k = base + j
            delta = cand_ref[0, k]
            inv_delta = cand_ref[1, k]                 # hoisted reciprocal
            lo = cand_ref[2, k]                        # zero-point folded into bounds
            hi = cand_ref[3, k]
            x_q = jnp.clip(jnp.round(x * inv_delta), lo, hi)
            abs_err = jnp.abs(x - x_q * delta)
            # IEEE: log(0) = -inf -> exp(-inf) = 0, so no guard needed.  Degenerate
            # candidates (delta == 0) go NaN and are excluded in the selection,
            # matching the PyTorch "score < best_score" loop that skips NaN scores.
            err_p = jnp.exp(jnp.float32(2.4) * jnp.log(abs_err))
            rows.append(jnp.sum(err_p, axis=0, keepdims=True))   # (1, 128)
        block = jnp.concatenate(rows, axis=0)          # (8, 128)
        sl = pl.ds(base, SUBLANES)                     # aligned single-vreg RMW
        acc_ref[sl, :] = acc_ref[sl, :] + block
        return carry

    lax.fori_loop(0, n_groups, group_body, 0)


def _quant_kernel(params_ref, x_ref, o_ref):
    """Elementwise fake-quant (forward value of the round_ste path).
       params_ref: SMEM (3,) = [delta, zero_point, n_levels - 1]."""
    delta = params_ref[0]
    zp = params_ref[1]
    qmax = params_ref[2]
    x = x_ref[...]
    # Keep x / delta (not x * (1/delta)) so the forward matches round(x/delta)
    # bit-for-bit; this pass is HBM-bound so the divide is hidden anyway.
    x_int = jnp.round(x / delta) + zp
    x_q = jnp.clip(x_int, 0.0, qmax)
    o_ref[...] = (x_q - zp) * delta


# --------------------------------------------------------------------------
# pallas_call wrappers
# --------------------------------------------------------------------------

def compute_stats(x2d, tile_rows, steps):
    rows = x2d.shape[0]
    assert rows == N_CORES * steps * tile_rows
    out = pl.pallas_call(
        _stats_kernel,
        out_shape=jax.ShapeDtypeStruct((N_CORES * SUBLANES, LANES), jnp.float32),
        grid=(N_CORES, steps),
        in_specs=[pl.BlockSpec((tile_rows, LANES),
                               lambda c, r: (c * steps + r, 0))],
        out_specs=pl.BlockSpec((SUBLANES, LANES), lambda c, r: (c, 0)),
        compiler_params=pltpu.CompilerParams(
            dimension_semantics=("parallel", "arbitrary"),
            vmem_limit_bytes=VMEM_LIMIT),
    )(x2d)
    return out.reshape(N_CORES, SUBLANES, LANES)


def compute_scores(x2d, cand_table, tile_rows, steps):
    rows = x2d.shape[0]
    k_total = cand_table.shape[1]
    assert rows == N_CORES * steps * tile_rows and k_total % SUBLANES == 0
    out = pl.pallas_call(
        _score_kernel,
        out_shape=jax.ShapeDtypeStruct((N_CORES * k_total, LANES), jnp.float32),
        grid=(N_CORES, steps),
        in_specs=[pl.BlockSpec(memory_space=pltpu.MemorySpace.SMEM),
                  pl.BlockSpec((tile_rows, LANES),
                               lambda c, r: (c * steps + r, 0))],
        out_specs=pl.BlockSpec((k_total, LANES), lambda c, r: (c, 0)),
        compiler_params=pltpu.CompilerParams(
            dimension_semantics=("parallel", "arbitrary"),
            vmem_limit_bytes=VMEM_LIMIT),
    )(cand_table, x2d)
    return out.reshape(N_CORES, k_total, LANES)


def quant_dequant(x2d, params, tile_rows):
    rows = x2d.shape[0]
    return pl.pallas_call(
        _quant_kernel,
        out_shape=jax.ShapeDtypeStruct((rows, LANES), jnp.float32),
        grid=(pl.cdiv(rows, tile_rows),),
        in_specs=[pl.BlockSpec(memory_space=pltpu.MemorySpace.SMEM),
                  pl.BlockSpec((tile_rows, LANES), lambda i: (i, 0))],
        out_specs=pl.BlockSpec((tile_rows, LANES), lambda i: (i, 0)),
        compiler_params=pltpu.CompilerParams(
            dimension_semantics=("parallel",),
            vmem_limit_bytes=VMEM_LIMIT),
    )(params, x2d)


# --------------------------------------------------------------------------
# Candidate table / pad corrections (plain JAX glue on tiny arrays)
# --------------------------------------------------------------------------

def _build_candidates(x_min, x_max, x_mean, x_absmax):
    idx = np.arange(N_CAND, dtype=np.float32)
    fac = jnp.asarray(1.0 - idx * 0.01, dtype=jnp.float32)               # (80,)
    i_f = jnp.asarray(idx)
    bits = np.arange(2, 9)
    qmax_b = jnp.asarray((2.0 ** bits - 1.0).astype(np.float32))          # (7,)
    zp_sym_b = jnp.asarray((2.0 ** (bits - 1) - 1.0).astype(np.float32))  # (7,)

    # --- symmetric candidates (sym_quantize search) ---
    new_max_sym = x_absmax * fac
    d_sym = 2.0 * new_max_sym[None, :] / qmax_b[:, None]                  # (7,80)
    zp_sym_q = jnp.broadcast_to(zp_sym_b[:, None], (N_BIT_SLOTS, N_CAND))
    s_zp_sym = jnp.broadcast_to(jnp.where(x_min < 0, zp_sym_b[:, None], 0.0),
                                (N_BIT_SLOTS, N_CAND))

    # --- asymmetric candidates (asym_quantize search, t == 3) ---
    step_left = (x_mean - x_min) / 100.0
    step_right = (x_max - x_mean) / 100.0
    new_min = x_mean - step_left * i_f
    new_max = x_mean + step_right * i_f
    d_asym = (new_max - new_min)[None, :] / qmax_b[:, None]               # (7,80)
    zp_asym_q = jnp.round(-new_min[None, :] / d_asym)
    s_zp_asym = jnp.where(new_min[None, :] < 0, zp_asym_q, 0.0)

    q_delta = jnp.stack([d_sym, d_asym])                                  # (2,7,80)
    q_zp = jnp.stack([zp_sym_q, zp_asym_q])
    q_max = jnp.broadcast_to(qmax_b[None, :, None], (N_MODES, N_BIT_SLOTS, N_CAND))
    s_delta = q_delta
    s_zp = jnp.stack([s_zp_sym, s_zp_asym])

    delta_f = q_delta.reshape(-1)
    inv_delta_f = 1.0 / delta_f          # inf where delta == 0 (same IEEE path as x/0)
    zp_f = q_zp.reshape(-1)
    lo_f = -zp_f
    hi_f = q_max.reshape(-1) - zp_f
    cand_table = jnp.stack([delta_f, inv_delta_f, lo_f, hi_f],
                           axis=0).astype(jnp.float32)                    # (4, 1120)
    return cand_table, s_delta.astype(jnp.float32), s_zp.astype(jnp.float32)


def _pad_score_correction(cand_table, pad_value, pad_count):
    """Pad elements all equal pad_value; their score contribution is analytic.
    Mirrors the kernel math exactly (x*inv_delta, clip(lo,hi), *delta, exp(2.4*log))."""
    delta = cand_table[0]
    inv_delta = cand_table[1]
    lo = cand_table[2]
    hi = cand_table[3]
    x_q = jnp.clip(jnp.round(pad_value * inv_delta), lo, hi)
    abs_err = jnp.abs(pad_value - x_q * delta)
    err_p = jnp.exp(jnp.float32(2.4) * jnp.log(abs_err))
    return jnp.float32(pad_count) * err_p


def _ref_scores(x, cand_table):
    """Pure-JAX reference of the score-kernel math (for the self-check)."""
    xf = x.reshape(-1).astype(jnp.float32)
    delta = cand_table[0][:, None]
    inv_delta = cand_table[1][:, None]
    lo = cand_table[2][:, None]
    hi = cand_table[3][:, None]
    x_q = jnp.clip(jnp.round(xf[None, :] * inv_delta), lo, hi)
    abs_err = jnp.abs(xf[None, :] - x_q * delta)
    err_p = jnp.exp(jnp.float32(2.4) * jnp.log(abs_err))
    return jnp.sum(err_p, axis=1) / jnp.float32(xf.shape[0])


# --------------------------------------------------------------------------
# Jitted init (MSE scale search) and forward (fake-quant) paths
# --------------------------------------------------------------------------

def _init_impl(x):
    numel = int(np.prod(x.shape))
    tile_rows, steps, rows_total = _init_tiling(numel)

    xf = jnp.reshape(x, (-1,)).astype(jnp.float32)
    pad = rows_total * LANES - numel
    pad_value = xf[0]                                   # neutral for min/max
    if pad > 0:
        xf = jnp.concatenate([xf, jnp.broadcast_to(pad_value, (pad,))])
    x2d = xf.reshape(rows_total, LANES)

    stats = compute_stats(x2d, tile_rows, steps)        # (2, 8, 128)
    x_min = jnp.min(stats[:, 0, :])
    x_max = jnp.max(stats[:, 1, :])
    x_sum = jnp.sum(stats[:, 2, :]) - jnp.float32(pad) * pad_value
    x_mean = x_sum / jnp.float32(numel)
    x_absmax = jnp.maximum(jnp.abs(x_min), jnp.abs(x_max))

    cand_table, s_delta, s_zp = _build_candidates(x_min, x_max, x_mean, x_absmax)

    # Pallas hot path: 2 modes x 7 bits x 80 candidates full-tensor L2.4 losses.
    acc = compute_scores(x2d, cand_table, tile_rows, steps)   # (2, 1120, 128)
    raw_scores = jnp.sum(acc, axis=(0, 2))
    if pad > 0:
        raw_scores = raw_scores - _pad_score_correction(cand_table, pad_value, pad)
    scores = raw_scores.reshape(N_MODES, N_BIT_SLOTS, N_CAND) / jnp.float32(numel)

    # Replicate the "if score < best_score" (best_score = 100000) selection:
    # first occurrence of the minimum valid score; NaN/Inf automatically excluded.
    valid = scores < 100000.0
    masked = jnp.where(valid, scores, jnp.inf)
    best = jnp.argmin(masked, axis=-1)                  # (2, 7)
    any_valid = jnp.any(valid, axis=-1)

    sel_delta = jnp.take_along_axis(s_delta, best[..., None], axis=-1)[..., 0]
    sel_zp = jnp.take_along_axis(s_zp, best[..., None], axis=-1)[..., 0]
    delta_param = jnp.where(any_valid, sel_delta, 1.0)  # defaults (1.0, 0.0)
    zp_param = jnp.where(any_valid, sel_zp, 0.0)
    return (delta_param, zp_param, (x_min, x_max, x_mean, x_absmax),
            cand_table, scores)


_init_fn = jax.jit(_init_impl)


def _forward_impl(x, delta_raw, zero_point, qmax):
    shape = x.shape
    numel = int(np.prod(shape))
    rows8 = _round_up(-(-numel // LANES), SUBLANES)
    pad = rows8 * LANES - numel                         # <= 1023 elems; 0 when aligned
    tile_rows = min(TM_FWD, rows8)

    xf = jnp.reshape(x, (-1,)).astype(jnp.float32)
    if pad > 0:
        xf = jnp.concatenate([xf, jnp.zeros((pad,), jnp.float32)])
    x2d = xf.reshape(rows8, LANES)

    # grad_scale(d, s) forward value == |d|; STE only rewires gradients.
    delta = jnp.abs(delta_raw).astype(jnp.float32)
    params = jnp.stack([delta, zero_point.astype(jnp.float32),
                        qmax.astype(jnp.float32)])
    out = quant_dequant(x2d, params, tile_rows)
    out = out.reshape(-1)
    if pad > 0:
        out = out[:numel]
    return out.reshape(shape).astype(x.dtype)


_forward_fn = jax.jit(_forward_impl)


# --------------------------------------------------------------------------
# Module
# --------------------------------------------------------------------------

class UniformAffineQuantizerForACT:
    def __init__(self, n_bits: int = 8, symmetric: bool = False,
                 channel_wise: bool = False, scale_method: str = 'mse',
                 leaf_param: bool = False):
        # NOTE: the PyTorch subclass ignores n_bits/symmetric/channel_wise and uses
        # the base-class defaults, which we replicate here.
        self.scale_method = scale_method
        self.leaf_param = leaf_param
        self.n_bits = 8
        self.n_levels = 2 ** self.n_bits
        self.sym = True
        self.channel_wise = False
        self.inited = False
        self.delta_set_sym_layer = None
        self.zero_point_set_sym_layer = None
        self.delta_set_asym_layer = None
        self.zero_point_set_asym_layer = None
        # Debug handles (used by the self-checks in __main__).
        self._dbg_stats = None
        self._dbg_cand_table = None
        self._dbg_scores = None

    def set_quantization_bit(self, bit: int):
        assert 2 <= bit <= 8, 'bitwidth not supported'
        self.n_bits = bit
        self.n_levels = 2 ** bit

    def set_quantization_params(self, bit, symmetric, channel_wise=None):
        self.n_bits = bit
        self.n_levels = 2 ** bit
        self.sym = symmetric
        self.channel_wise = channel_wise

    # ---------------- init (MSE scale search) ----------------
    def init_quantization_scale(self, x):
        delta_param, zp_param, stats_dbg, cand_table, scores = _init_fn(x)
        self.delta_set_sym_layer = delta_param[0][None, :]          # (1, 7)
        self.zero_point_set_sym_layer = zp_param[0][None, :]
        self.delta_set_asym_layer = delta_param[1][None, :]
        self.zero_point_set_asym_layer = zp_param[1][None, :]
        self._dbg_stats = stats_dbg
        self._dbg_cand_table = cand_table
        self._dbg_scores = scores

    # ---------------- forward ----------------
    def __call__(self, x):
        if x.ndim not in (2, 4):
            raise ValueError('shape error')
        if not self.inited:
            self.init_quantization_scale(x)
            self.inited = True

        bit_idx = self.n_bits - 2
        if self.sym:
            delta_raw = self.delta_set_sym_layer[0, bit_idx]
            zero_point = self.zero_point_set_sym_layer[0, bit_idx]
        else:
            delta_raw = self.delta_set_asym_layer[0, bit_idx]
            zero_point = self.zero_point_set_asym_layer[0, bit_idx]

        # TODO(synk): with leaf_param=False the reference calls float(delta).view(...)
        # which would raise in PyTorch; we implement the value-equivalent scalar
        # broadcast path (same numerics as leaf_param=True).
        # TODO(synk): only the forward value is implemented; round_ste / grad_scale
        # gradients would need a custom_vjp.
        return _forward_fn(x, delta_raw, zero_point,
                           jnp.float32(self.n_levels - 1))


# --------------------------------------------------------------------------
# Demo / self-checks
# --------------------------------------------------------------------------

def _run_and_check(x):
    q = UniformAffineQuantizerForACT()
    y = jax.block_until_ready(q(x))
    assert y.shape == x.shape
    assert bool(jnp.all(jnp.isfinite(y)))

    # (a) tiled stats kernel vs plain JAX.
    x_min, x_max, x_mean, x_absmax = q._dbg_stats
    np.testing.assert_allclose(float(x_min), float(jnp.min(x)), rtol=1e-6)
    np.testing.assert_allclose(float(x_max), float(jnp.max(x)), rtol=1e-6)
    np.testing.assert_allclose(float(x_absmax), float(jnp.max(jnp.abs(x))), rtol=1e-6)
    np.testing.assert_allclose(float(x_mean), float(jnp.mean(x)), rtol=1e-4, atol=1e-5)

    # (b) tiled + padded score accumulation vs plain-JAX reference.
    got = np.asarray(q._dbg_scores).reshape(-1)
    ref = np.asarray(_ref_scores(x, q._dbg_cand_table))
    finite = np.isfinite(got) & np.isfinite(ref)
    assert finite.any()
    np.testing.assert_allclose(got[finite], ref[finite], rtol=1e-3, atol=1e-6)

    # (c) forward fake-quant vs plain-JAX with the selected scale/zero-point
    #     (allow at most one quantization level of slack for rounding ulps).
    bit_idx = q.n_bits - 2
    delta = float(jnp.abs(q.delta_set_sym_layer[0, bit_idx]))
    zp = float(q.zero_point_set_sym_layer[0, bit_idx])
    ref_y = (jnp.clip(jnp.round(x / delta) + zp, 0, q.n_levels - 1) - zp) * delta
    max_diff = float(jnp.max(jnp.abs(y - ref_y)))
    assert max_diff <= delta + 1e-6, f"max diff {max_diff} exceeds one level {delta}"


if __name__ == "__main__":
    key = jax.random.PRNGKey(0)
    k1, k2, k3 = jax.random.split(key, 3)

    # Aligned NCHW activation (numel divisible by 8*128 -> zero-copy forward path).
    x1 = jax.random.normal(k1, (2, 4, 16, 16), dtype=jnp.float32)
    _run_and_check(x1)

    # Unaligned NCHW activation (exercises the small-pad + correction path).
    x2 = jax.random.normal(k2, (2, 3, 7, 5), dtype=jnp.float32)
    _run_and_check(x2)

    # 2-D activation [N, F].
    x3 = jax.random.normal(k3, (8, 32), dtype=jnp.float32)
    _run_and_check(x3)

    print("KERNEL_OK")
</pallas_src>

<mosaic_0001>
module attributes {stable_mosaic.version = 11 : i64} {
  func.func @_stats_kernel(%arg0: i32, %arg1: i32, %arg2: memref<8x128xf32, #tpu.memory_space<vmem>>, %arg3: memref<8x128xf32, #tpu.memory_space<vmem>>) attributes {dimension_semantics = [#tpu.dimension_semantics<parallel>, #tpu.dimension_semantics<arbitrary>], iteration_bounds = array<i64: 2, 1>, scalar_prefetch = 0 : i64, scratch_operands = 0 : i64, tpu.core_type = #tpu.core_type<tc>, window_params = [{transform_indices = @transform_0, window_bounds = array<i64: 8, 128>}, {transform_indices = @transform_1, window_bounds = array<i64: 8, 128>}]} {
    %c0 = arith.constant 0 : index
    %c0_0 = arith.constant 0 : index
    %0 = vector.load %arg2[%c0, %c0_0] : memref<8x128xf32, #tpu.memory_space<vmem>>, vector<8x128xf32>
    %cst = arith.constant dense<0x7F800000> : vector<128xf32>
    %1 = vector.multi_reduction <minimumf>, %0, %cst [0] : vector<8x128xf32> to vector<128xf32>
    %2 = vector.shape_cast %1 : vector<128xf32> to vector<1x128xf32>
    %cst_1 = arith.constant dense<0xFF800000> : vector<128xf32>
    %3 = vector.multi_reduction <maximumf>, %0, %cst_1 [0] : vector<8x128xf32> to vector<128xf32>
    %4 = vector.shape_cast %3 : vector<128xf32> to vector<1x128xf32>
    %cst_2 = arith.constant dense<0.000000e+00> : vector<128xf32>
    %5 = vector.multi_reduction <add>, %0, %cst_2 [0] : vector<8x128xf32> to vector<128xf32>
    %6 = vector.shape_cast %5 : vector<128xf32> to vector<1x128xf32>
    %c0_i32 = arith.constant 0 : i32
    %7 = arith.cmpi eq, %arg1, %c0_i32 : i32
    %8 = arith.extui %7 : i1 to i32
    %c0_i32_3 = arith.constant 0 : i32
    %9 = arith.cmpi ne, %8, %c0_i32_3 : i32
    scf.if %9 {
      %c0_6 = arith.constant 0 : index
      %c0_7 = arith.constant 0 : index
      %13 = vector.load %arg3[%c0_6, %c0_7] : memref<8x128xf32, #tpu.memory_space<vmem>>, vector<1x128xf32>
      tpu.vector_store %arg3[%c0_6, %c0_7], %2 {strides = array<i32>} : memref<8x128xf32, #tpu.memory_space<vmem>>, vector<1x128xf32>,
      %c1 = arith.constant 1 : index
      %c0_8 = arith.constant 0 : index
      %14 = vector.load %arg3[%c1, %c0_8] : memref<8x128xf32, #tpu.memory_space<vmem>>, vector<1x128xf32>
      tpu.vector_store %arg3[%c1, %c0_8], %4 {strides = array<i32>} : memref<8x128xf32, #tpu.memory_space<vmem>>, vector<1x128xf32>,
      %c2 = arith.constant 2 : index
      %c0_9 = arith.constant 0 : index
      %15 = vector.load %arg3[%c2, %c0_9] : memref<8x128xf32, #tpu.memory_space<vmem>>, vector<1x128xf32>
      tpu.vector_store %arg3[%c2, %c0_9], %6 {strides = array<i32>} : memref<8x128xf32, #tpu.memory_space<vmem>>, vector<1x128xf32>,
      %cst_10 = arith.constant 0.000000e+00 : f32
      %16 = vector.broadcast %cst_10 : f32 to vector<5x128xf32>
      %c3 = arith.constant 3 : index
      %c0_11 = arith.constant 0 : index
      %17 = vector.load %arg3[%c3, %c0_11] : memref<8x128xf32, #tpu.memory_space<vmem>>, vector<5x128xf32>
      tpu.vector_store %arg3[%c3, %c0_11], %16 {strides = array<i32>} : memref<8x128xf32, #tpu.memory_space<vmem>>, vector<5x128xf32>,
    } else {
    }
    %c0_i32_4 = arith.constant 0 : i32
    %10 = arith.cmpi sgt, %arg1, %c0_i32_4 : i32
    %11 = arith.extui %10 : i1 to i32
    %c0_i32_5 = arith.constant 0 : i32
    %12 = arith.cmpi ne, %11, %c0_i32_5 : i32
    scf.if %12 {
      %c0_6 = arith.constant 0 : index
      %c0_7 = arith.constant 0 : index
      %13 = vector.load %arg3[%c0_6, %c0_7] : memref<8x128xf32, #tpu.memory_space<vmem>>, vector<1x128xf32>
      %14 = arith.minimumf %13, %2 : vector<1x128xf32>
      %c0_8 = arith.constant 0 : index
      %c0_9 = arith.constant 0 : index
      %15 = vector.load %arg3[%c0_8, %c0_9] : memref<8x128xf32, #tpu.memory_space<vmem>>, vector<1x128xf32>
      tpu.vector_store %arg3[%c0_8, %c0_9], %14 {strides = array<i32>} : memref<8x128xf32, #tpu.memory_space<vmem>>, vector<1x128xf32>,
      %c1 = arith.constant 1 : index
      %c0_10 = arith.constant 0 : index
      %16 = vector.load %arg3[%c1, %c0_10] : memref<8x128xf32, #tpu.memory_space<vmem>>, vector<1x128xf32>
      %17 = arith.maximumf %16, %4 : vector<1x128xf32>
      %c1_11 = arith.constant 1 : index
      %c0_12 = arith.constant 0 : index
      %18 = vector.load %arg3[%c1_11, %c0_12] : memref<8x128xf32, #tpu.memory_space<vmem>>, vector<1x128xf32>
      tpu.vector_store %arg3[%c1_11, %c0_12], %17 {strides = array<i32>} : memref<8x128xf32, #tpu.memory_space<vmem>>, vector<1x128xf32>,
      %c2 = arith.constant 2 : index
      %c0_13 = arith.constant 0 : index
      %19 = vector.load %arg3[%c2, %c0_13] : memref<8x128xf32, #tpu.memory_space<vmem>>, vector<1x128xf32>
      %20 = arith.addf %19, %6 : vector<1x128xf32>
      %c2_14 = arith.constant 2 : index
      %c0_15 = arith.constant 0 : index
      %21 = vector.load %arg3[%c2_14, %c0_15] : memref<8x128xf32, #tpu.memory_space<vmem>>, vector<1x128xf32>
      tpu.vector_store %arg3[%c2_14, %c0_15], %20 {strides = array<i32>} : memref<8x128xf32, #tpu.memory_space<vmem>>, vector<1x128xf32>,
    } else {
    }
    return
  }
  func.func @transform_0(%arg0: i32, %arg1: i32) -> (i32, i32) {
    %c1_i32 = arith.constant 1 : i32
    %0 = arith.muli %arg0, %c1_i32 : i32
    %1 = arith.addi %0, %arg1 : i32
    %c0_i32 = arith.constant 0 : i32
    %c0_i32_0 = arith.constant 0 : i32
    return %1, %c0_i32 : i32, i32
  }
  func.func @transform_1(%arg0: i32, %arg1: i32) -> (i32, i32) {
    %c0_i32 = arith.constant 0 : i32
    %c0_i32_0 = arith.constant 0 : i32
    return %arg0, %c0_i32 : i32, i32
  }
}

module attributes {stable_mosaic.version = 11 : i64} {
  func.func @_score_kernel(%arg0: i32, %arg1: i32, %arg2: memref<4x1120xf32, #tpu.memory_space<smem>>, %arg3: memref<8x128xf32, #tpu.memory_space<vmem>>, %arg4: memref<1120x128xf32, #tpu.memory_space<vmem>>) attributes {dimension_semantics = [#tpu.dimension_semantics<parallel>, #tpu.dimension_semantics<arbitrary>], iteration_bounds = array<i64: 2, 1>, scalar_prefetch = 0 : i64, scratch_operands = 0 : i64, tpu.core_type = #tpu.core_type<tc>, window_params = [{transform_indices = @transform_0, window_bounds = array<i64: 4, 1120>}, {transform_indices = @transform_1, window_bounds = array<i64: 8, 128>}, {transform_indices = @transform_2, window_bounds = array<i64: 1120, 128>}]} {
    %c0_i32 = arith.constant 0 : i32
    %0 = arith.cmpi eq, %arg1, %c0_i32 : i32
    %1 = arith.extui %0 : i1 to i32
    %c0_i32_0 = arith.constant 0 : i32
    %2 = arith.cmpi ne, %1, %c0_i32_0 : i32
    scf.if %2 {
      %cst = arith.constant 0.000000e+00 : f32
      %5 = vector.broadcast %cst : f32 to vector<1120x128xf32>
      %c0_4 = arith.constant 0 : index
      %c0_5 = arith.constant 0 : index
      %6 = vector.load %arg4[%c0_4, %c0_5] : memref<1120x128xf32, #tpu.memory_space<vmem>>, vector<1120x128xf32>
      tpu.vector_store %arg4[%c0_4, %c0_5], %5 {strides = array<i32>} : memref<1120x128xf32, #tpu.memory_space<vmem>>, vector<1120x128xf32>,
    } else {
    }
    %c0 = arith.constant 0 : index
    %c0_1 = arith.constant 0 : index
    %3 = vector.load %arg3[%c0, %c0_1] : memref<8x128xf32, #tpu.memory_space<vmem>>, vector<8x128xf32>
    %c0_i32_2 = arith.constant 0 : i32
    %c140_i32 = arith.constant 140 : i32
    %4 = arith.addi %c0_i32_2, %c140_i32 : i32
    %c1_i32 = arith.constant 1 : i32
    scf.for %arg5 = %c0_i32_2 to %4 step %c1_i32  : i32 {
      %c8_i32 = arith.constant 8 : i32
      %5 = arith.muli %arg5, %c8_i32 : i32
      %6 = tpu.assume_multiple %5, 8 : i32
      %c0_i32_4 = arith.constant 0 : i32
      %7 = arith.addi %6, %c0_i32_4 : i32
      %c0_5 = arith.constant 0 : index
      %8 = arith.index_cast %7 : i32 to index
      %9 = memref.load %arg2[%c0_5, %8] : memref<4x1120xf32, #tpu.memory_space<smem>>
      %c1 = arith.constant 1 : index
      %10 = arith.index_cast %7 : i32 to index
      %11 = memref.load %arg2[%c1, %10] : memref<4x1120xf32, #tpu.memory_space<smem>>
      %c2 = arith.constant 2 : index
      %12 = arith.index_cast %7 : i32 to index
      %13 = memref.load %arg2[%c2, %12] : memref<4x1120xf32, #tpu.memory_space<smem>>
      %c3 = arith.constant 3 : index
      %14 = arith.index_cast %7 : i32 to index
      %15 = memref.load %arg2[%c3, %14] : memref<4x1120xf32, #tpu.memory_space<smem>>
      %16 = vector.broadcast %11 : f32 to vector<8x128xf32>
      %17 = arith.mulf %3, %16 : vector<8x128xf32>
      %18 = math.roundeven %17 : vector<8x128xf32>
      %19 = vector.broadcast %13 : f32 to vector<8x128xf32>
      %20 = arith.maximumf %19, %18 : vector<8x128xf32>
      %21 = vector.broadcast %15 : f32 to vector<8x128xf32>
      %22 = arith.minimumf %21, %20 : vector<8x128xf32>
      %23 = vector.broadcast %9 : f32 to vector<8x128xf32>
      %24 = arith.mulf %22, %23 : vector<8x128xf32>
      %25 = arith.subf %3, %24 : vector<8x128xf32>
      %26 = math.absf %25 : vector<8x128xf32>
      %27 = math.log %26 : vector<8x128xf32>
      %cst = arith.constant 2.400000e+00 : f32
      %28 = vector.broadcast %cst : f32 to vector<8x128xf32>
      %29 = arith.mulf %28, %27 : vector<8x128xf32>
      %30 = math.exp %29 : vector<8x128xf32>
      %cst_6 = arith.constant dense<0.000000e+00> : vector<128xf32>
      %31 = vector.multi_reduction <add>, %30, %cst_6 [0] : vector<8x128xf32> to vector<128xf32>
      %32 = vector.shape_cast %31 : vector<128xf32> to vector<1x128xf32>
      %c1_i32_7 = arith.constant 1 : i32
      %33 = arith.addi %6, %c1_i32_7 : i32
      %c0_8 = arith.constant 0 : index
      %34 = arith.index_cast %33 : i32 to index
      %35 = memref.load %arg2[%c0_8, %34] : memref<4x1120xf32, #tpu.memory_space<smem>>
      %c1_9 = arith.constant 1 : index
      %36 = arith.index_cast %33 : i32 to index
      %37 = memref.load %arg2[%c1_9, %36] : memref<4x1120xf32, #tpu.memory_space<smem>>
      %c2_10 = arith.constant 2 : index
      %38 = arith.index_cast %33 : i32 to index
      %39 = memref.load %arg2[%c2_10, %38] : memref<4x1120xf32, #tpu.memory_space<smem>>
      %c3_11 = arith.constant 3 : index
      %40 = arith.index_cast %33 : i32 to index
      %41 = memref.load %arg2[%c3_11, %40] : memref<4x1120xf32, #tpu.memory_space<smem>>
      %42 = vector.broadcast %37 : f32 to vector<8x128xf32>
      %43 = arith.mulf %3, %42 : vector<8x128xf32>
      %44 = math.roundeven %43 : vector<8x128xf32>
      %45 = vector.broadcast %39 : f32 to vector<8x128xf32>
      %46 = arith.maximumf %45, %44 : vector<8x128xf32>
      %47 = vector.broadcast %41 : f32 to vector<8x128xf32>
      %48 = arith.minimumf %47, %46 : vector<8x128xf32>
      %49 = vector.broadcast %35 : f32 to vector<8x128xf32>
      %50 = arith.mulf %48, %49 : vector<8x128xf32>
      %51 = arith.subf %3, %50 : vector<8x128xf32>
      %52 = math.absf %51 : vector<8x128xf32>
      %53 = math.log %52 : vector<8x128xf32>
      %cst_12 = arith.constant 2.400000e+00 : f32
      %54 = vector.broadcast %cst_12 : f32 to vector<8x128xf32>
      %55 = arith.mulf %54, %53 : vector<8x128xf32>
      %56 = math.exp %55 : vector<8x128xf32>
      %cst_13 = arith.constant dense<0.000000e+00> : vector<128xf32>
      %57 = vector.multi_reduction <add>, %56, %cst_13 [0] : vector<8x128xf32> to vector<128xf32>
      %58 = vector.shape_cast %57 : vector<128xf32> to vector<1x128xf32>
      %c2_i32 = arith.constant 2 : i32
      %59 = arith.addi %6, %c2_i32 : i32
      %c0_14 = arith.constant 0 : index
      %60 = arith.index_cast %59 : i32 to index
      %61 = memref.load %arg2[%c0_14, %60] : memref<4x1120xf32, #tpu.memory_space<smem>>
      %c1_15 = arith.constant 1 : index
      %62 = arith.index_cast %59 : i32 to index
      %63 = memref.load %arg2[%c1_15, %62] : memref<4x1120xf32, #tpu.memory_space<smem>>
      %c2_16 = arith.constant 2 : index
      %64 = arith.index_cast %59 : i32 to index
      %65 = memref.load %arg2[%c2_16, %64] : memref<4x1120xf32, #tpu.memory_space<smem>>
      %c3_17 = arith.constant 3 : index
      %66 = arith.index_cast %59 : i32 to index
      %67 = memref.load %arg2[%c3_17, %66] : memref<4x1120xf32, #tpu.memory_space<smem>>
      %68 = vector.broadcast %63 : f32 to vector<8x128xf32>
      %69 = arith.mulf %3, %68 : vector<8x128xf32>
      %70 = math.roundeven %69 : vector<8x128xf32>
      %71 = vector.broadcast %65 : f32 to vector<8x128xf32>
      %72 = arith.maximumf %71, %70 : vector<8x128xf32>
      %73 = vector.broadcast %67 : f32 to vector<8x128xf32>
      %74 = arith.minimumf %73, %72 : vector<8x128xf32>
      %75 = vector.broadcast %61 : f32 to vector<8x128xf32>
      %76 = arith.mulf %74, %75 : vector<8x128xf32>
      %77 = arith.subf %3, %76 : vector<8x128xf32>
      %78 = math.absf %77 : vector<8x128xf32>
      %79 = math.log %78 : vector<8x128xf32>
      %cst_18 = arith.constant 2.400000e+00 : f32
      %80 = vector.broadcast %cst_18 : f32 to vector<8x128xf32>
      %81 = arith.mulf %80, %79 : vector<8x128xf32>
      %82 = math.exp %81 : vector<8x128xf32>
      %cst_19 = arith.constant dense<0.000000e+00> : vector<128xf32>
      %83 = vector.multi_reduction <add>, %82, %cst_19 [0] : vector<8x128xf32> to vector<128xf32>
      %84 = vector.shape_cast %83 : vector<128xf32> to vector<1x128xf32>
      %c3_i32 = arith.constant 3 : i32
      %85 = arith.addi %6, %c3_i32 : i32
      %c0_20 = arith.constant 0 : index
      %86 = arith.index_cast %85 : i32 to index
      %87 = memref.load %arg2[%c0_20, %86] : memref<4x1120xf32, #tpu.memory_space<smem>>
      %c1_21 = arith.constant 1 : index
      %88 = arith.index_cast %85 : i32 to index
      %89 = memref.load %arg2[%c1_21, %88] : memref<4x1120xf32, #tpu.memory_space<smem>>
      %c2_22 = arith.constant 2 : index
      %90 = arith.index_cast %85 : i32 to index
      %91 = memref.load %arg2[%c2_22, %90] : memref<4x1120xf32, #tpu.memory_space<smem>>
      %c3_23 = arith.constant 3 : index
      %92 = arith.index_cast %85 : i32 to index
      %93 = memref.load %arg2[%c3_23, %92] : memref<4x1120xf32, #tpu.memory_space<smem>>
      %94 = vector.broadcast %89 : f32 to vector<8x128xf32>
      %95 = arith.mulf %3, %94 : vector<8x128xf32>
      %96 = math.roundeven %95 : vector<8x128xf32>
      %97 = vector.broadcast %91 : f32 to vector<8x128xf32>
      %98 = arith.maximumf %97, %96 : vector<8x128xf32>
      %99 = vector.broadcast %93 : f32 to vector<8x128xf32>
      %100 = arith.minimumf %99, %98 : vector<8x128xf32>
      %101 = vector.broadcast %87 : f32 to vector<8x128xf32>
      %102 = arith.mulf %100, %101 : vector<8x128xf32>
      %103 = arith.subf %3, %102 : vector<8x128xf32>
      %104 = math.absf %103 : vector<8x128xf32>
      %105 = math.log %104 : vector<8x128xf32>
      %cst_24 = arith.constant 2.400000e+00 : f32
      %106 = vector.broadcast %cst_24 : f32 to vector<8x128xf32>
      %107 = arith.mulf %106, %105 : vector<8x128xf32>
      %108 = math.exp %107 : vector<8x128xf32>
      %cst_25 = arith.constant dense<0.000000e+00> : vector<128xf32>
      %109 = vector.multi_reduction <add>, %108, %cst_25 [0] : vector<8x128xf32> to vector<128xf32>
      %110 = vector.shape_cast %109 : vector<128xf32> to vector<1x128xf32>
      %c4_i32 = arith.constant 4 : i32
      %111 = arith.addi %6, %c4_i32 : i32
      %c0_26 = arith.constant 0 : index
      %112 = arith.index_cast %111 : i32 to index
      %113 = memref.load %arg2[%c0_26, %112] : memref<4x1120xf32, #tpu.memory_space<smem>>
      %c1_27 = arith.constant 1 : index
      %114 = arith.index_cast %111 : i32 to index
      %115 = memref.load %arg2[%c1_27, %114] : memref<4x1120xf32, #tpu.memory_space<smem>>
      %c2_28 = arith.constant 2 : index
      %116 = arith.index_cast %111 : i32 to index
      %117 = memref.load %arg2[%c2_28, %116] : memref<4x1120xf32, #tpu.memory_space<smem>>
      %c3_29 = arith.constant 3 : index
      %118 = arith.index_cast %111 : i32 to index
      %119 = memref.load %arg2[%c3_29, %118] : memref<4x1120xf32, #tpu.memory_space<smem>>
      %120 = vector.broadcast %115 : f32 to vector<8x128xf32>
      %121 = arith.mulf %3, %120 : vector<8x128xf32>
      %122 = math.roundeven %121 : vector<8x128xf32>
      %123 = vector.broadcast %117 : f32 to vector<8x128xf32>
      %124 = arith.maximumf %123, %122 : vector<8x128xf32>
      %125 = vector.broadcast %119 : f32 to vector<8x128xf32>
      %126 = arith.minimumf %125, %124 : vector<8x128xf32>
      %127 = vector.broadcast %113 : f32 to vector<8x128xf32>
      %128 = arith.mulf %126, %127 : vector<8x128xf32>
      %129 = arith.subf %3, %128 : vector<8x128xf32>
      %130 = math.absf %129 : vector<8x128xf32>
      %131 = math.log %130 : vector<8x128xf32>
      %cst_30 = arith.constant 2.400000e+00 : f32
      %132 = vector.broadcast %cst_30 : f32 to vector<8x128xf32>
      %133 = arith.mulf %132, %131 : vector<8x128xf32>
      %134 = math.exp %133 : vector<8x128xf32>
      %cst_31 = arith.constant dense<0.000000e+00> : vector<128xf32>
      %135 = vector.multi_reduction <add>, %134, %cst_31 [0] : vector<8x128xf32> to vector<128xf32>
      %136 = vector.shape_cast %135 : vector<128xf32> to vector<1x128xf32>
      %c5_i32 = arith.constant 5 : i32
      %137 = arith.addi %6, %c5_i32 : i32
      %c0_32 = arith.constant 0 : index
      %138 = arith.index_cast %137 : i32 to index
      %139 = memref.load %arg2[%c0_32, %138] : memref<4x1120xf32, #tpu.memory_space<smem>>
      %c1_33 = arith.constant 1 : index
      %140 = arith.index_cast %137 : i32 to index
      %141 = memref.load %arg2[%c1_33, %140] : memref<4x1120xf32, #tpu.memory_space<smem>>
      %c2_34 = arith.constant 2 : index
      %142 = arith.index_cast %137 : i32 to index
      %143 = memref.load %arg2[%c2_34, %142] : memref<4x1120xf32, #tpu.memory_space<smem>>
      %c3_35 = arith.constant 3 : index
      %144 = arith.index_cast %137 : i32 to index
      %145 = memref.load %arg2[%c3_35, %144] : memref<4x1120xf32, #tpu.memory_space<smem>>
      %146 = vector.broadcast %141 : f32 to vector<8x128xf32>
      %147 = arith.mulf %3, %146 : vector<8x128xf32>
      %148 = math.roundeven %147 : vector<8x128xf32>
      %149 = vector.broadcast %143 : f32 to vector<8x128xf32>
      %150 = arith.maximumf %149, %148 : vector<8x128xf32>
      %151 = vector.broadcast %145 : f32 to vector<8x128xf32>
      %152 = arith.minimumf %151, %150 : vector<8x128xf32>
      %153 = vector.broadcast %139 : f32 to vector<8x128xf32>
      %154 = arith.mulf %152, %153 : vector<8x128xf32>
      %155 = arith.subf %3, %154 : vector<8x128xf32>
      %156 = math.absf %155 : vector<8x128xf32>
      %157 = math.log %156 : vector<8x128xf32>
      %cst_36 = arith.constant 2.400000e+00 : f32
      %158 = vector.broadcast %cst_36 : f32 to vector<8x128xf32>
      %159 = arith.mulf %158, %157 : vector<8x128xf32>
      %160 = math.exp %159 : vector<8x128xf32>
      %cst_37 = arith.constant dense<0.000000e+00> : vector<128xf32>
      %161 = vector.multi_reduction <add>, %160, %cst_37 [0] : vector<8x128xf32> to vector<128xf32>
      %162 = vector.shape_cast %161 : vector<128xf32> to vector<1x128xf32>
      %c6_i32 = arith.constant 6 : i32
      %163 = arith.addi %6, %c6_i32 : i32
      %c0_38 = arith.constant 0 : index
      %164 = arith.index_cast %163 : i32 to index
      %165 = memref.load %arg2[%c0_38, %164] : memref<4x1120xf32, #tpu.memory_space<smem>>
      %c1_39 = arith.constant 1 : index
      %166 = arith.index_cast %163 : i32 to index
      %167 = memref.load %arg2[%c1_39, %166] : memref<4x1120xf32, #tpu.memory_space<smem>>
      %c2_40 = arith.constant 2 : index
      %168 = arith.index_cast %163 : i32 to index
      %169 = memref.load %arg2[%c2_40, %168] : memref<4x1120xf32, #tpu.memory_space<smem>>
      %c3_41 = arith.constant 3 : index
      %170 = arith.index_cast %163 : i32 to index
      %171 = memref.load %arg2[%c3_41, %170] : memref<4x1120xf32, #tpu.memory_space<smem>>
      %172 = vector.broadcast %167 : f32 to vector<8x128xf32>
      %173 = arith.mulf %3, %172 : vector<8x128xf32>
      %174 = math.roundeven %173 : vector<8x128xf32>
      %175 = vector.broadcast %169 : f32 to vector<8x128xf32>
      %176 = arith.maximumf %175, %174 : vector<8x128xf32>
      %177 = vector.broadcast %171 : f32 to vector<8x128xf32>
      %178 = arith.minimumf %177, %176 : vector<8x128xf32>
      %179 = vector.broadcast %165 : f32 to vector<8x128xf32>
      %180 = arith.mulf %178, %179 : vector<8x128xf32>
      %181 = arith.subf %3, %180 : vector<8x128xf32>
      %182 = math.absf %181 : vector<8x128xf32>
      %183 = math.log %182 : vector<8x128xf32>
      %cst_42 = arith.constant 2.400000e+00 : f32
      %184 = vector.broadcast %cst_42 : f32 to vector<8x128xf32>
      %185 = arith.mulf %184, %183 : vector<8x128xf32>
      %186 = math.exp %185 : vector<8x128xf32>
      %cst_43 = arith.constant dense<0.000000e+00> : vector<128xf32>
      %187 = vector.multi_reduction <add>, %186, %cst_43 [0] : vector<8x128xf32> to vector<128xf32>
      %188 = vector.shape_cast %187 : vector<128xf32> to vector<1x128xf32>
      %c7_i32 = arith.constant 7 : i32
      %189 = arith.addi %6, %c7_i32 : i32
      %c0_44 = arith.constant 0 : index
      %190 = arith.index_cast %189 : i32 to index
      %191 = memref.load %arg2[%c0_44, %190] : memref<4x1120xf32, #tpu.memory_space<smem>>
      %c1_45 = arith.constant 1 : index
      %192 = arith.index_cast %189 : i32 to index
      %193 = memref.load %arg2[%c1_45, %192] : memref<4x1120xf32, #tpu.memory_space<smem>>
      %c2_46 = arith.constant 2 : index
      %194 = arith.index_cast %189 : i32 to index
      %195 = memref.load %arg2[%c2_46, %194] : memref<4x1120xf32, #tpu.memory_space<smem>>
      %c3_47 = arith.constant 3 : index
      %196 = arith.index_cast %189 : i32 to index
      %197 = memref.load %arg2[%c3_47, %196] : memref<4x1120xf32, #tpu.memory_space<smem>>
      %198 = vector.broadcast %193 : f32 to vector<8x128xf32>
      %199 = arith.mulf %3, %198 : vector<8x128xf32>
      %200 = math.roundeven %199 : vector<8x128xf32>
      %201 = vector.broadcast %195 : f32 to vector<8x128xf32>
      %202 = arith.maximumf %201, %200 : vector<8x128xf32>
      %203 = vector.broadcast %197 : f32 to vector<8x128xf32>
      %204 = arith.minimumf %203, %202 : vector<8x128xf32>
      %205 = vector.broadcast %191 : f32 to vector<8x128xf32>
      %206 = arith.mulf %204, %205 : vector<8x128xf32>
      %207 = arith.subf %3, %206 : vector<8x128xf32>
      %208 = math.absf %207 : vector<8x128xf32>
      %209 = math.log %208 : vector<8x128xf32>
      %cst_48 = arith.constant 2.400000e+00 : f32
      %210 = vector.broadcast %cst_48 : f32 to vector<8x128xf32>
      %211 = arith.mulf %210, %209 : vector<8x128xf32>
      %212 = math.exp %211 : vector<8x128xf32>
      %cst_49 = arith.constant dense<0.000000e+00> : vector<128xf32>
      %213 = vector.multi_reduction <add>, %212, %cst_49 [0] : vector<8x128xf32> to vector<128xf32>
      %214 = vector.shape_cast %213 : vector<128xf32> to vector<1x128xf32>
      %215 = tpu.concatenate %32, %58, %84, %110, %136, %162, %188, %214 in 0 : vector<1x128xf32>, vector<1x128xf32>, vector<1x128xf32>, vector<1x128xf32>, vector<1x128xf32>, vector<1x128xf32>, vector<1x128xf32>, vector<1x128xf32> -> vector<8x128xf32>
      %216 = arith.index_cast %6 : i32 to index
      %c0_50 = arith.constant 0 : index
      %217 = vector.load %arg4[%216, %c0_50] : memref<1120x128xf32, #tpu.memory_space<vmem>>, vector<8x128xf32>
      %218 = arith.addf %217, %215 : vector<8x128xf32>
      %219 = arith.index_cast %6 : i32 to index
      %c0_51 = arith.constant 0 : index
      %220 = vector.load %arg4[%219, %c0_51] : memref<1120x128xf32, #tpu.memory_space<vmem>>, vector<8x128xf32>
      tpu.vector_store %arg4[%219, %c0_51], %218 {strides = array<i32>} : memref<1120x128xf32, #tpu.memory_space<vmem>>, vector<8x128xf32>,
    }
    %c140_i32_3 = arith.constant 140 : i32
    return
  }
  func.func @transform_0(%arg0: i32, %arg1: i32) -> (i32, i32) {
    %c0_i32 = arith.constant 0 : i32
    %c0_i32_0 = arith.constant 0 : i32
    %c0_i32_1 = arith.constant 0 : i32
    return %c0_i32, %c0_i32_0 : i32, i32
  }
  func.func @transform_1(%arg0: i32, %arg1: i32) -> (i32, i32) {
    %c1_i32 = arith.constant 1 : i32
    %0 = arith.muli %arg0, %c1_i32 : i32
    %1 = arith.addi %0, %arg1 : i32
    %c0_i32 = arith.constant 0 : i32
    %c0_i32_0 = arith.constant 0 : i32
    return %1, %c0_i32 : i32, i32
  }
  func.func @transform_2(%arg0: i32, %arg1: i32) -> (i32, i32) {
    %c0_i32 = arith.constant 0 : i32
    %c0_i32_0 = arith.constant 0 : i32
    return %arg0, %c0_i32 : i32, i32
  }
}

</mosaic_0001>

<llo_original>
// kernel: _init_impl.2
$region0: #{_init_impl.2}
  #allocation0 [shape = 'u32[]', space=smem, size = 0x4, offset = 0x4, fixed_abs, tag = 'smem constant byte address 0x4 - core index']
  #allocation1 [shape = 'u32[72,128]{1,0:T(1,128)}', space=vmem, size = 0x9000, scoped, tag = 'internal scratch']
  %s0 = inlined_call_operand.vmem [shape: f32[16,128], index: 0, kind: input, shape index: {}]
  %s1 = inlined_call_operand.vmem [shape: f32[16,128], index: 1, kind: output, shape index: {}]
  %s2 = sld [smem:[#allocation0]]
  $region45: #{_init_impl.2} parent=0
    _
  %s4 = ssub.s32 1, %s2
  %s5 = scalar_select 0, %s4, %s2
  loop: start=0, step=1, limit=4
  $region2: #{_init_impl.2} parent=0 // loop_pre_header
    _
  $region3: #{_init_impl.2} parent=0 // loop_header
    %s7 = sphi 0, %s11
    %p8 = scmp.ge.s32.totalorder %s7, 4
    %s14 = sphi 0, %s26
    %s15 = sphi 0, %s22
    %s16 = sphi 0, %s14
    %s17 = sphi 0, %s15
    %s18 = sphi 0, %s16
    %s19 = sphi 0, %s17
    %s31 = sphi 0, %s33
    %s34 = sphi 0, %s31
    %s35 = sphi 0, %s34
    %s51 = sphi 0, %s35
    %s57 = sphi 0, %s59
    %s60 = sphi 0, %s57
    %s61 = sphi 0, %s60
    %s77 = sphi 0, %s61
  $region4: #{_init_impl.2} parent=0 // loop_header_branch
    %10 = sbr.rel (%p8) target = $region8
  $region5: #{_init_impl.2} parent=0 // loop_body
    %s12 = ssub.s32 %s7, 1
    %s13 = ssub.s32 %s7, 2
    %s20 = sadd.s32 1, %s15
    %p21 = scmp.ge.s32.totalorder %s20, 1
    %s22 = scalar_select %p21, 0, %s20
    %s23 = sadd.s32 1, %s14
    %s24 = scalar_select %p21, %s23, %s14
    %p25 = scmp.ge.s32.totalorder %s24, 2
    %s26 = scalar_select %p25, 0, %s24
    %s27 = sadd.s32 %s14, %s15
    %s28 = sadd.s32 %s26, %s22
    %s29 = ssub.s32 %s27, %s28
    %p30 = scmp.eq.s32.totalorder %s29, 0
    %s32 = sadd.s32 %s31, 1
    %s33 = scalar_select %p30, %s31, %s32
    %p36 = pneg %p30
    %p37 = scmp.eq.s32.totalorder %s7, 1
    %p38 = por %p36, %p37
    %p39 = scmp.ne.s32.totalorder %s31, %s34
    %p40 = scmp.eq.s32.totalorder %s7, 0
    %p41 = por %p39, %p40
    %p42 = scmp.ne.s32.totalorder %s31, %s34
    %p43 = scmp.eq.s32.totalorder %s12, 1
    %p44 = por %p42, %p43
    %p45 = scmp.ne.s32.totalorder %s34, %s35
    %p46 = scmp.eq.s32.totalorder %s12, 0
    %p47 = por %p45, %p46
    %p48 = scmp.ne.s32.totalorder %s34, %s35
    %p49 = scmp.eq.s32.totalorder %s13, 1
    %p50 = por %p48, %p49
    %p52 = scmp.ne.s32.totalorder %s35, %s51
    %p53 = scmp.eq.s32.totalorder %s13, 0
    %p54 = por %p52, %p53
    %s55 = ssub.s32 %s14, %s26
    %p56 = scmp.eq.s32.totalorder %s55, 0
    %s58 = sadd.s32 %s57, 1
    %s59 = scalar_select %p56, %s57, %s58
    %p62 = pneg %p56
    %p63 = scmp.eq.s32.totalorder %s7, 1
    %p64 = por %p62, %p63
    %p65 = scmp.ne.s32.totalorder %s57, %s60
    %p66 = scmp.eq.s32.totalorder %s7, 0
    %p67 = por %p65, %p66
    %p68 = scmp.ne.s32.totalorder %s57, %s60
    %p69 = scmp.eq.s32.totalorder %s12, 1
    %p70 = por %p68, %p69
    %p71 = scmp.ne.s32.totalorder %s60, %s61
    %p72 = scmp.eq.s32.totalorder %s12, 0
    %p73 = por %p71, %p72
    %p74 = scmp.ne.s32.totalorder %s60, %s61
    %p75 = scmp.eq.s32.totalorder %s13, 1
    %p76 = por %p74, %p75
    %p78 = scmp.ne.s32.totalorder %s61, %s77
    %p79 = scmp.eq.s32.totalorder %s13, 0
    %p80 = por %p78, %p79
    %p81 = scmp.le.s32.totalorder 1, %s7
    %p82 = scmp.lt.s32.totalorder %s7, 3
    %p83 = pnand %p81, %p82
    %p84 = pneg %p83
    // Predicated region
    $region9: #{_init_impl.2} parent=5 // pred_check
      _
    $region10: #{_init_impl.2} parent=5 // pred_check_branch
      %86 = sbr.rel (%p83) target = $region12
    $region11: #{_init_impl.2} parent=5 // pred_region
      %s87 = ssub.s32 %s7, 1
    $region12: #{_init_impl.2} parent=5 // pred_fallthru
      _
    %p88 = scmp.lt.s32.totalorder %s7, 2
    // Predicated region
    $region13: #{_init_impl.2} parent=5 // pred_check
      %p89 = pneg %p88
    $region14: #{_init_impl.2} parent=5 // pred_check_branch
      %91 = sbr.rel (%p89) target = $region16
    $region15: #{_init_impl.2} parent=5 // pred_region
      // Predicated region
      $region17: #{_init_impl.2} parent=15 // pred_check
        %p92 = pneg %p41
      $region18: #{_init_impl.2} parent=15 // pred_check_branch
        %94 = sbr.rel (%p92) target = $region20
      $region19: #{_init_impl.2} parent=15 // pred_region
        %s95 = sadd.s32 %s14, %s15
        %p96 = scmp.lt.s32.totalorder %s95, 1
        %s97 = scalar_select %p96, %s95, 1
        %s98 = smul.addr %s97, 8
        %s99 = scalar_lea.vmem %s0, %s98
        %s100 = sadd.s32 %s14, %s15
      $region20: #{_init_impl.2} parent=15 // pred_fallthru
        _
    $region16: #{_init_impl.2} parent=5 // pred_fallthru
      _
    %p101 = scmp.le.s32.totalorder 1, %s7
    %p102 = scmp.lt.s32.totalorder %s7, 3
    %p103 = pnand %p101, %p102
    %p104 = pneg %p103
    // Predicated region
    $region21: #{_init_impl.2} parent=5 // pred_check
      _
    $region22: #{_init_impl.2} parent=5 // pred_check_branch
      %106 = sbr.rel (%p103) target = $region24
    $region23: #{_init_impl.2} parent=5 // pred_region
      %s107 = ssub.s32 %s7, 1
      %s108 = sadd.s32 %s16, %s17
      %p109 = scmp.lt.s32.totalorder %s108, 1
      %s110 = scalar_select %p109, %s108, 1
      %s111 = smul.addr %s110, 8
      %s112 = scalar_lea.vmem %s0, %s111
      %p113 = pneg %p47
      %p114 = pneg %p44
      %p115 = pneg %p73
      %p116 = pneg %p70
      %p117 = scmp.lt.s32.totalorder %s16, 1
      %s118 = scalar_select %p117, %s16, 1
      %s119 = smul.addr %s118, 8
      %s120 = scalar_lea.vmem %s1, %s119
      %s121 = sadd.s32 %s16, %s17
      %p122 = scmp.lt.s32.totalorder %s121, 1
      %s123 = scalar_select %p122, %s121, 1
      %s124 = smul.addr %s123, 8
      %s125 = scalar_lea.vmem %s0, %s124
      %s126 = sadd.s32 %s16, %s17
      %p127 = scmp.lt.s32.totalorder %s16, 1
      %s128 = scalar_select %p127, %s16, 1
      %s129 = smul.addr %s128, 8
      %s130 = scalar_lea.vmem %s1, %s129
      %v131 = vld [vmem:[%s125] sm:$0xff]
      %v132 = vrot.slane %v131, 4
      %v133 = vmin.f32 %v131, %v132
      %v134 = vrot.slane %v133, 2
      %v135 = vmin.f32 %v133, %v134
      %v136 = vrot.slane %v135, 1
      %v137 = vmin.f32 %v135, %v136
      %v138 = vrot.slane %v131, 4
      %v139 = vmax.f32 %v131, %v138
      %v140 = vrot.slane %v139, 2
      %v141 = vmax.f32 %v139, %v140
      %v142 = vrot.slane %v141, 1
      %v143 = vmax.f32 %v141, %v142
      %v144 = vrot.slane %v131, 4
      %v145 = vadd.f32 %v131, %v144
      %v146 = vrot.slane %v145, 2
      %v147 = vadd.f32 %v145, %v146
      %v148 = vrot.slane %v147, 1
      %v149 = vadd.f32 %v147, %v148
      %p150 = scmp.eq.s32.totalorder %s17, 0
      // Predicated region
      $region25: #{_init_impl.2} parent=23 // pred_check
        %p151 = pneg %p150
      $region26: #{_init_impl.2} parent=23 // pred_check_branch
        %153 = sbr.rel (%p151) target = $region28
      $region27: #{_init_impl.2} parent=23 // pred_region
        %154 = vst [vmem:[%s130] sm:$0x1] %v137
        %155 = vst [vmem:[%s130 + $0x1] sm:$0x1] %v143
        %156 = vst [vmem:[%s130 + $0x2] sm:$0x1] %v149
        %157 = vst [vmem:[%s130 + $0x3] sm:$0x1f] 0.0
      $region28: #{_init_impl.2} parent=23 // pred_fallthru
        _
      %p158 = scmp.gt.s32.totalorder %s17, 0
      // Predicated region
      $region29: #{_init_impl.2} parent=23 // pred_check
        %p159 = pneg %p158
      $region30: #{_init_impl.2} parent=23 // pred_check_branch
        %161 = sbr.rel (%p159) target = $region32
      $region31: #{_init_impl.2} parent=23 // pred_region
        %v162 = vld [vmem:[%s130] sm:$0x1]
        %v163 = vmin.f32 %v162, %v137
        %164 = vst [vmem:[%s130] sm:$0x1] %v163
        %v165 = vld [vmem:[%s130 + $0x1] sm:$0x1]
        %v166 = vmax.f32 %v165, %v143
        %167 = vst [vmem:[%s130 + $0x1] sm:$0x1] %v166
        %v168 = vld [vmem:[%s130 + $0x2] sm:$0x1]
        %v169 = vadd.f32 %v168, %v149
        %170 = vst [vmem:[%s130 + $0x2] sm:$0x1] %v169
      $region32: #{_init_impl.2} parent=23 // pred_fallthru
        _
      %p171 = scmp.lt.s32.totalorder %s16, 1
      %s172 = scalar_select %p171, %s16, 1
      %s173 = smul.addr %s172, 8
      %s174 = scalar_lea.vmem %s1, %s173
      // Predicated region
      $region33: #{_init_impl.2} parent=23 // pred_check
        %p175 = pneg %p70
      $region34: #{_init_impl.2} parent=23 // pred_check_branch
        %177 = sbr.rel (%p175) target = $region36
      $region35: #{_init_impl.2} parent=23 // pred_region
        _
      $region36: #{_init_impl.2} parent=23 // pred_fallthru
        _
    $region24: #{_init_impl.2} parent=5 // pred_fallthru
      _
    %p178 = scmp.le.s32.totalorder 2, %s7
    // Predicated region
    $region37: #{_init_impl.2} parent=5 // pred_check
      %p179 = pneg %p178
    $region38: #{_init_impl.2} parent=5 // pred_check_branch
      %181 = sbr.rel (%p179) target = $region40
    $region39: #{_init_impl.2} parent=5 // pred_region
      %s182 = ssub.s32 %s7, 2
      // Predicated region
      $region41: #{_init_impl.2} parent=39 // pred_check
        %p183 = pneg %p76
      $region42: #{_init_impl.2} parent=39 // pred_check_branch
        %185 = sbr.rel (%p183) target = $region44
      $region43: #{_init_impl.2} parent=39 // pred_region
        %p186 = scmp.lt.s32.totalorder %s18, 1
        %s187 = scalar_select %p186, %s18, 1
        %s188 = smul.addr %s187, 8
        %s189 = scalar_lea.vmem %s1, %s188
      $region44: #{_init_impl.2} parent=39 // pred_fallthru
        _
    $region40: #{_init_impl.2} parent=5 // pred_fallthru
      _
  $region6: #{_init_impl.2} parent=0 // loop_footer
    %s11 = sadd.s32 1, %s7
  $region7: #{_init_impl.2} parent=0 // loop_footer_branch
    %6 = sbr.rel target = $region3
  $region8: #{_init_impl.2} parent=0 // loop_exit
    _

// kernel: _init_impl.3
$region0: #{_init_impl.3}
  #allocation0 [shape = 'u32[]', space=smem, size = 0x4, offset = 0x4, fixed_abs, tag = 'smem constant byte address 0x4 - core index']
  #allocation1 [shape = 'u32[72,128]{1,0:T(1,128)}', space=vmem, size = 0x9000, scoped, tag = 'internal scratch']
  %s0 = inlined_call_operand.vmem [shape: f32[4,1120], index: 0, kind: input, shape index: {}]
  %s1 = inlined_call_operand.vmem [shape: f32[16,128], index: 1, kind: input, shape index: {}]
  %s2 = inlined_call_operand.vmem [shape: f32[2240,128], index: 2, kind: output, shape index: {}]
  %s3 = sld [smem:[#allocation0]]
  $region56: #{_init_impl.3} parent=0
    _
  %s5 = ssub.s32 1, %s3
  %s6 = scalar_select 0, %s5, %s3
  $region1: #{_init_impl.3} parent=0
    #allocation2 [shape = 'u8[18432]{0}', space=smem, size = 0x4800, scoped, tag = 'input window, operand 0, single buffered']
    #allocation3 [shape = 's32[2]{0}', space=sflag, size = 0x8, scoped, tag = 'scoped memory for _init_impl.3']
    %7 = vsyncpa [#allocation3], 0
    loop: start=0, step=1, limit=4
    $region2: #{_init_impl.3} parent=1 // loop_pre_header
      _
    $region3: #{_init_impl.3} parent=1 // loop_header
      %s9 = sphi 0, %s13
      %p10 = scmp.ge.s32.totalorder %s9, 4
      %s16 = sphi 0, %s28
      %s17 = sphi 0, %s24
      %s18 = sphi 0, %s16
      %s19 = sphi 0, %s17
      %s20 = sphi 0, %s18
      %s21 = sphi 0, %s19
      %s29 = sphi 0, %s29
      %s31 = sphi 0, %s29
      %s32 = sphi 0, %s31
      %s46 = sphi 0, %s32
      %s54 = sphi 0, %s56
      %s57 = sphi 0, %s54
      %s58 = sphi 0, %s57
      %s74 = sphi 0, %s58
      %s80 = sphi 0, %s82
      %s83 = sphi 0, %s80
      %s84 = sphi 0, %s83
      %s100 = sphi 0, %s84
    $region4: #{_init_impl.3} parent=1 // loop_header_branch
      %12 = sbr.rel (%p10) target = $region8
    $region5: #{_init_impl.3} parent=1 // loop_body
      %s14 = ssub.s32 %s9, 1
      %s15 = ssub.s32 %s9, 2
      %s22 = sadd.s32 1, %s17
      %p23 = scmp.ge.s32.totalorder %s22, 1
      %s24 = scalar_select %p23, 0, %s22
      %s25 = sadd.s32 1, %s16
      %s26 = scalar_select %p23, %s25, %s16
      %p27 = scmp.ge.s32.totalorder %s26, 2
      %s28 = scalar_select %p27, 0, %s26
      %s30 = sadd.s32 %s29, 1
      %p33 = scmp.eq.s32.totalorder %s9, 1
      %p34 = scmp.ne.s32.totalorder %s29, %s31
      %p35 = scmp.eq.s32.totalorder %s9, 0
      %p36 = por %p34, %p35
      %p37 = scmp.ne.s32.totalorder %s29, %s31
      %p38 = scmp.eq.s32.totalorder %s14, 1
      %p39 = por %p37, %p38
      %p40 = scmp.ne.s32.totalorder %s31, %s32
      %p41 = scmp.eq.s32.totalorder %s14, 0
      %p42 = por %p40, %p41
      %p43 = scmp.ne.s32.totalorder %s31, %s32
      %p44 = scmp.eq.s32.totalorder %s15, 1
      %p45 = por %p43, %p44
      %p47 = scmp.ne.s32.totalorder %s32, %s46
      %p48 = scmp.eq.s32.totalorder %s15, 0
      %p49 = por %p47, %p48
      %s50 = sadd.s32 %s16, %s17
      %s51 = sadd.s32 %s28, %s24
      %s52 = ssub.s32 %s50, %s51
      %p53 = scmp.eq.s32.totalorder %s52, 0
      %s55 = sadd.s32 %s54, 1
      %s56 = scalar_select %p53, %s54, %s55
      %p59 = pneg %p53
      %p60 = scmp.eq.s32.totalorder %s9, 1
      %p61 = por %p59, %p60
      %p62 = scmp.ne.s32.totalorder %s54, %s57
      %p63 = scmp.eq.s32.totalorder %s9, 0
      %p64 = por %p62, %p63
      %p65 = scmp.ne.s32.totalorder %s54, %s57
      %p66 = scmp.eq.s32.totalorder %s14, 1
      %p67 = por %p65, %p66
      %p68 = scmp.ne.s32.totalorder %s57, %s58
      %p69 = scmp.eq.s32.totalorder %s14, 0
      %p70 = por %p68, %p69
      %p71 = scmp.ne.s32.totalorder %s57, %s58
      %p72 = scmp.eq.s32.totalorder %s15, 1
      %p73 = por %p71, %p72
      %p75 = scmp.ne.s32.totalorder %s58, %s74
      %p76 = scmp.eq.s32.totalorder %s15, 0
      %p77 = por %p75, %p76
      %s78 = ssub.s32 %s16, %s28
      %p79 = scmp.eq.s32.totalorder %s78, 0
      %s81 = sadd.s32 %s80, 1
      %s82 = scalar_select %p79, %s80, %s81
      %p85 = pneg %p79
      %p86 = scmp.eq.s32.totalorder %s9, 1
      %p87 = por %p85, %p86
      %p88 = scmp.ne.s32.totalorder %s80, %s83
      %p89 = scmp.eq.s32.totalorder %s9, 0
      %p90 = por %p88, %p89
      %p91 = scmp.ne.s32.totalorder %s80, %s83
      %p92 = scmp.eq.s32.totalorder %s14, 1
      %p93 = por %p91, %p92
      %p94 = scmp.ne.s32.totalorder %s83, %s84
      %p95 = scmp.eq.s32.totalorder %s14, 0
      %p96 = por %p94, %p95
      %p97 = scmp.ne.s32.totalorder %s83, %s84
      %p98 = scmp.eq.s32.totalorder %s15, 1
      %p99 = por %p97, %p98
      %p101 = scmp.ne.s32.totalorder %s84, %s100
      %p102 = scmp.eq.s32.totalorder %s15, 0
      %p103 = por %p101, %p102
      %p104 = scmp.le.s32.totalorder 1, %s9
      %p105 = scmp.lt.s32.totalorder %s9, 3
      %p106 = pnand %p104, %p105
      %p107 = pneg %p106
      // Predicated region
      $region9: #{_init_impl.3} parent=5 // pred_check
        _
      $region10: #{_init_impl.3} parent=5 // pred_check_branch
        %109 = sbr.rel (%p106) target = $region12
      $region11: #{_init_impl.3} parent=5 // pred_region
        %s110 = ssub.s32 %s9, 1
        // Predicated region
        $region13: #{_init_impl.3} parent=11 // pred_check
          %p111 = pneg %p42
        $region14: #{_init_impl.3} parent=11 // pred_check_branch
          %113 = sbr.rel (%p111) target = $region16
        $region15: #{_init_impl.3} parent=11 // pred_region
          %115 = vsyncadd [#allocation3], 0
          %s117 = sshll.u32 %s0, 4
          %s118 = int_to_ptr.vmem [resolvable:$true] %s117
          %120 = dma.vmem_to_smem %s118, 576, [#allocation2], [#allocation3]
        $region16: #{_init_impl.3} parent=11 // pred_fallthru
          _
      $region12: #{_init_impl.3} parent=5 // pred_fallthru
        _
      %p121 = scmp.lt.s32.totalorder %s9, 2
      // Predicated region
      $region17: #{_init_impl.3} parent=5 // pred_check
        %p122 = pneg %p121
      $region18: #{_init_impl.3} parent=5 // pred_check_branch
        %124 = sbr.rel (%p122) target = $region20
      $region19: #{_init_impl.3} parent=5 // pred_region
        // Predicated region
        $region21: #{_init_impl.3} parent=19 // pred_check
          %p125 = pneg %p64
        $region22: #{_init_impl.3} parent=19 // pred_check_branch
          %127 = sbr.rel (%p125) target = $region24
        $region23: #{_init_impl.3} parent=19 // pred_region
          %s128 = sadd.s32 %s16, %s17
          %p129 = scmp.lt.s32.totalorder %s128, 1
          %s130 = scalar_select %p129, %s128, 1
          %s131 = smul.addr %s130, 8
          %s132 = scalar_lea.vmem %s1, %s131
          %s133 = sadd.s32 %s16, %s17
        $region24: #{_init_impl.3} parent=19 // pred_fallthru
          _
      $region20: #{_init_impl.3} parent=5 // pred_fallthru
        _
      %p134 = scmp.le.s32.totalorder 1, %s9
      %p135 = scmp.lt.s32.totalorder %s9, 3
      %p136 = pnand %p134, %p135
      %p137 = pneg %p136
      // Predicated region
      $region25: #{_init_impl.3} parent=5 // pred_check
        _
      $region26: #{_init_impl.3} parent=5 // pred_check_branch
        %139 = sbr.rel (%p136) target = $region28
      $region27: #{_init_impl.3} parent=5 // pred_region
        %s140 = ssub.s32 %s9, 1
        // Predicated region
        $region29: #{_init_impl.3} parent=27 // pred_check
          %p141 = pneg %p42
        $region30: #{_init_impl.3} parent=27 // pred_check_branch
          %143 = sbr.rel (%p141) target = $region32
        $region31: #{_init_impl.3} parent=27 // pred_region
          %145 = dma.done [#allocation3], 576
        $region32: #{_init_impl.3} parent=27 // pred_fallthru
          _
        %146 = sfence
        %p147 = pneg %p42
        %p148 = pneg %p39
        %s149 = sadd.s32 %s18, %s19
        %p150 = scmp.lt.s32.totalorder %s149, 1
        %s151 = scalar_select %p150, %s149, 1
        %s152 = smul.addr %s151, 8
        %s153 = scalar_lea.vmem %s1, %s152
        %p154 = pneg %p70
        %p155 = pneg %p67
        %p156 = pneg %p96
        %p157 = pneg %p93
        %s158 = smul.u32 140, %s18
        %p159 = scmp.lt.s32.totalorder %s158, 279
        %s160 = scalar_select %p159, %s158, 279
        %s161 = smul.addr %s160, 8
        %s162 = scalar_lea.vmem %s2, %s161
        %s163 = sadd.s32 %s18, %s19
        %p164 = scmp.lt.s32.totalorder %s163, 1
        %s165 = scalar_select %p164, %s163, 1
        %s166 = smul.addr %s165, 8
        %s167 = scalar_lea.vmem %s1, %s166
        %s168 = sadd.s32 %s18, %s19
        %s169 = smul.u32 140, %s18
        %p170 = scmp.lt.s32.totalorder %s169, 279
        %s171 = scalar_select %p170, %s169, 279
        %s172 = smul.addr %s171, 8
        %s173 = scalar_lea.vmem %s2, %s172
        %s174 = smul.u32 140, %s18
        %p175 = scmp.eq.s32.totalorder %s19, 0
        // Predicated region
        $region33: #{_init_impl.3} parent=27 // pred_check
          %p176 = pneg %p175
        $region34: #{_init_impl.3} parent=27 // pred_check_branch
          %178 = sbr.rel (%p176) target = $region36
        $region35: #{_init_impl.3} parent=27 // pred_region
          %179 = vst [vmem:[%s173] sm:$0xff] 0.0
          %180 = vst [vmem:[%s173 + $0x8] sm:$0xff] 0.0
          %181 = vst [vmem:[%s173 + $0x10] sm:$0xff] 0.0
          %182 = vst [vmem:[%s173 + $0x18] sm:$0xff] 0.0
          %183 = vst [vmem:[%s173 + $0x20] sm:$0xff] 0.0
          %184 = vst [vmem:[%s173 + $0x28] sm:$0xff] 0.0
          %185 = vst [vmem:[%s173 + $0x30] sm:$0xff] 0.0
          %186 = vst [vmem:[%s173 + $0x38] sm:$0xff] 0.0
          %187 = vst [vmem:[%s173 + $0x40] sm:$0xff] 0.0
          %188 = vst [vmem:[%s173 + $0x48] sm:$0xff] 0.0
          %189 = vst [vmem:[%s173 + $0x50] sm:$0xff] 0.0
          %190 = vst [vmem:[%s173 + $0x58] sm:$0xff] 0.0
          %191 = vst [vmem:[%s173 + $0x60] sm:$0xff] 0.0
          %192 = vst [vmem:[%s173 + $0x68] sm:$0xff] 0.0
          %193 = vst [vmem:[%s173 + $0x70] sm:$0xff] 0.0
          %194 = vst [vmem:[%s173 + $0x78] sm:$0xff] 0.0
          %195 = vst [vmem:[%s173 + $0x80] sm:$0xff] 0.0
          %196 = vst [vmem:[%s173 + $0x88] sm:$0xff] 0.0
          %197 = vst [vmem:[%s173 + $0x90] sm:$0xff] 0.0
          %198 = vst [vmem:[%s173 + $0x98] sm:$0xff] 0.0
          %199 = vst [vmem:[%s173 + $0xa0] sm:$0xff] 0.0
          %200 = vst [vmem:[%s173 + $0xa8] sm:$0xff] 0.0
          %201 = vst [vmem:[%s173 + $0xb0] sm:$0xff] 0.0
          %202 = vst [vmem:[%s173 + $0xb8] sm:$0xff] 0.0
          %203 = vst [vmem:[%s173 + $0xc0] sm:$0xff] 0.0
          %204 = vst [vmem:[%s173 + $0xc8] sm:$0xff] 0.0
          %205 = vst [vmem:[%s173 + $0xd0] sm:$0xff] 0.0
          %206 = vst [vmem:[%s173 + $0xd8] sm:$0xff] 0.0
          %207 = vst [vmem:[%s173 + $0xe0] sm:$0xff] 0.0
          %208 = vst [vmem:[%s173 + $0xe8] sm:$0xff] 0.0
          %209 = vst [vmem:[%s173 + $0xf0] sm:$0xff] 0.0
          %210 = vst [vmem:[%s173 + $0xf8] sm:$0xff] 0.0
          %211 = vst [vmem:[%s173 + $0x100] sm:$0xff] 0.0
          %212 = vst [vmem:[%s173 + $0x108] sm:$0xff] 0.0
          %213 = vst [vmem:[%s173 + $0x110] sm:$0xff] 0.0
          %214 = vst [vmem:[%s173 + $0x118] sm:$0xff] 0.0
          %215 = vst [vmem:[%s173 + $0x120] sm:$0xff] 0.0
          %216 = vst [vmem:[%s173 + $0x128] sm:$0xff] 0.0
          %217 = vst [vmem:[%s173 + $0x130] sm:$0xff] 0.0
          %218 = vst [vmem:[%s173 + $0x138] sm:$0xff] 0.0
          %219 = vst [vmem:[%s173 + $0x140] sm:$0xff] 0.0
          %220 = vst [vmem:[%s173 + $0x148] sm:$0xff] 0.0
          %221 = vst [vmem:[%s173 + $0x150] sm:$0xff] 0.0
          %222 = vst [vmem:[%s173 + $0x158] sm:$0xff] 0.0
          %223 = vst [vmem:[%s173 + $0x160] sm:$0xff] 0.0
          %224 = vst [vmem:[%s173 + $0x168] sm:$0xff] 0.0
          %225 = vst [vmem:[%s173 + $0x170] sm:$0xff] 0.0
          %226 = vst [vmem:[%s173 + $0x178] sm:$0xff] 0.0
          %227 = vst [vmem:[%s173 + $0x180] sm:$0xff] 0.0
          %228 = vst [vmem:[%s173 + $0x188] sm:$0xff] 0.0
          %229 = vst [vmem:[%s173 + $0x190] sm:$0xff] 0.0
          %230 = vst [vmem:[%s173 + $0x198] sm:$0xff] 0.0
          %231 = vst [vmem:[%s173 + $0x1a0] sm:$0xff] 0.0
          %232 = vst [vmem:[%s173 + $0x1a8] sm:$0xff] 0.0
          %233 = vst [vmem:[%s173 + $0x1b0] sm:$0xff] 0.0
          %234 = vst [vmem:[%s173 + $0x1b8] sm:$0xff] 0.0
          %235 = vst [vmem:[%s173 + $0x1c0] sm:$0xff] 0.0
          %236 = vst [vmem:[%s173 + $0x1c8] sm:$0xff] 0.0
          %237 = vst [vmem:[%s173 + $0x1d0] sm:$0xff] 0.0
          %238 = vst [vmem:[%s173 + $0x1d8] sm:$0xff] 0.0
          %239 = vst [vmem:[%s173 + $0x1e0] sm:$0xff] 0.0
          %240 = vst [vmem:[%s173 + $0x1e8] sm:$0xff] 0.0
          %241 = vst [vmem:[%s173 + $0x1f0] sm:$0xff] 0.0
          %242 = vst [vmem:[%s173 + $0x1f8] sm:$0xff] 0.0
          %243 = vst [vmem:[%s173 + $0x200] sm:$0xff] 0.0
          %244 = vst [vmem:[%s173 + $0x208] sm:$0xff] 0.0
          %245 = vst [vmem:[%s173 + $0x210] sm:$0xff] 0.0
          %246 = vst [vmem:[%s173 + $0x218] sm:$0xff] 0.0
          %247 = vst [vmem:[%s173 + $0x220] sm:$0xff] 0.0
          %248 = vst [vmem:[%s173 + $0x228] sm:$0xff] 0.0
          %249 = vst [vmem:[%s173 + $0x230] sm:$0xff] 0.0
          %250 = vst [vmem:[%s173 + $0x238] sm:$0xff] 0.0
          %251 = vst [vmem:[%s173 + $0x240] sm:$0xff] 0.0
          %252 = vst [vmem:[%s173 + $0x248] sm:$0xff] 0.0
          %253 = vst [vmem:[%s173 + $0x250] sm:$0xff] 0.0
          %254 = vst [vmem:[%s173 + $0x258] sm:$0xff] 0.0
          %255 = vst [vmem:[%s173 + $0x260] sm:$0xff] 0.0
          %256 = vst [vmem:[%s173 + $0x268] sm:$0xff] 0.0
          %257 = vst [vmem:[%s173 + $0x270] sm:$0xff] 0.0
          %258 = vst [vmem:[%s173 + $0x278] sm:$0xff] 0.0
          %259 = vst [vmem:[%s173 + $0x280] sm:$0xff] 0.0
          %260 = vst [vmem:[%s173 + $0x288] sm:$0xff] 0.0
          %261 = vst [vmem:[%s173 + $0x290] sm:$0xff] 0.0
          %262 = vst [vmem:[%s173 + $0x298] sm:$0xff] 0.0
          %263 = vst [vmem:[%s173 + $0x2a0] sm:$0xff] 0.0
          %264 = vst [vmem:[%s173 + $0x2a8] sm:$0xff] 0.0
          %265 = vst [vmem:[%s173 + $0x2b0] sm:$0xff] 0.0
          %266 = vst [vmem:[%s173 + $0x2b8] sm:$0xff] 0.0
          %267 = vst [vmem:[%s173 + $0x2c0] sm:$0xff] 0.0
          %268 = vst [vmem:[%s173 + $0x2c8] sm:$0xff] 0.0
          %269 = vst [vmem:[%s173 + $0x2d0] sm:$0xff] 0.0
          %270 = vst [vmem:[%s173 + $0x2d8] sm:$0xff] 0.0
          %271 = vst [vmem:[%s173 + $0x2e0] sm:$0xff] 0.0
          %272 = vst [vmem:[%s173 + $0x2e8] sm:$0xff] 0.0
          %273 = vst [vmem:[%s173 + $0x2f0] sm:$0xff] 0.0
          %274 = vst [vmem:[%s173 + $0x2f8] sm:$0xff] 0.0
          %275 = vst [vmem:[%s173 + $0x300] sm:$0xff] 0.0
          %276 = vst [vmem:[%s173 + $0x308] sm:$0xff] 0.0
          %277 = vst [vmem:[%s173 + $0x310] sm:$0xff] 0.0
          %278 = vst [vmem:[%s173 + $0x318] sm:$0xff] 0.0
          %279 = vst [vmem:[%s173 + $0x320] sm:$0xff] 0.0
          %280 = vst [vmem:[%s173 + $0x328] sm:$0xff] 0.0
          %281 = vst [vmem:[%s173 + $0x330] sm:$0xff] 0.0
          %282 = vst [vmem:[%s173 + $0x338] sm:$0xff] 0.0
          %283 = vst [vmem:[%s173 + $0x340] sm:$0xff] 0.0
          %284 = vst [vmem:[%s173 + $0x348] sm:$0xff] 0.0
          %285 = vst [vmem:[%s173 + $0x350] sm:$0xff] 0.0
          %286 = vst [vmem:[%s173 + $0x358] sm:$0xff] 0.0
          %287 = vst [vmem:[%s173 + $0x360] sm:$0xff] 0.0
          %288 = vst [vmem:[%s173 + $0x368] sm:$0xff] 0.0
          %289 = vst [vmem:[%s173 + $0x370] sm:$0xff] 0.0
          %290 = vst [vmem:[%s173 + $0x378] sm:$0xff] 0.0
          %291 = vst [vmem:[%s173 + $0x380] sm:$0xff] 0.0
          %292 = vst [vmem:[%s173 + $0x388] sm:$0xff] 0.0
          %293 = vst [vmem:[%s173 + $0x390] sm:$0xff] 0.0
          %294 = vst [vmem:[%s173 + $0x398] sm:$0xff] 0.0
          %295 = vst [vmem:[%s173 + $0x3a0] sm:$0xff] 0.0
          %296 = vst [vmem:[%s173 + $0x3a8] sm:$0xff] 0.0
          %297 = vst [vmem:[%s173 + $0x3b0] sm:$0xff] 0.0
          %298 = vst [vmem:[%s173 + $0x3b8] sm:$0xff] 0.0
          %299 = vst [vmem:[%s173 + $0x3c0] sm:$0xff] 0.0
          %300 = vst [vmem:[%s173 + $0x3c8] sm:$0xff] 0.0
          %301 = vst [vmem:[%s173 + $0x3d0] sm:$0xff] 0.0
          %302 = vst [vmem:[%s173 + $0x3d8] sm:$0xff] 0.0
          %303 = vst [vmem:[%s173 + $0x3e0] sm:$0xff] 0.0
          %304 = vst [vmem:[%s173 + $0x3e8] sm:$0xff] 0.0
          %305 = vst [vmem:[%s173 + $0x3f0] sm:$0xff] 0.0
          %306 = vst [vmem:[%s173 + $0x3f8] sm:$0xff] 0.0
          %307 = vst [vmem:[%s173 + $0x400] sm:$0xff] 0.0
          %308 = vst [vmem:[%s173 + $0x408] sm:$0xff] 0.0
          %309 = vst [vmem:[%s173 + $0x410] sm:$0xff] 0.0
          %310 = vst [vmem:[%s173 + $0x418] sm:$0xff] 0.0
          %311 = vst [vmem:[%s173 + $0x420] sm:$0xff] 0.0
          %312 = vst [vmem:[%s173 + $0x428] sm:$0xff] 0.0
          %313 = vst [vmem:[%s173 + $0x430] sm:$0xff] 0.0
          %314 = vst [vmem:[%s173 + $0x438] sm:$0xff] 0.0
          %315 = vst [vmem:[%s173 + $0x440] sm:$0xff] 0.0
          %316 = vst [vmem:[%s173 + $0x448] sm:$0xff] 0.0
          %317 = vst [vmem:[%s173 + $0x450] sm:$0xff] 0.0
          %318 = vst [vmem:[%s173 + $0x458] sm:$0xff] 0.0
        $region36: #{_init_impl.3} parent=27 // pred_fallthru
          _
        %v319 = vld [vmem:[%s167] sm:$0xff]
        loop: start=0, step=1, limit=140
        $region37: #{_init_impl.3} parent=27 // loop_pre_header
          _
        $region38: #{_init_impl.3} parent=27 // loop_header
          %s321 = sphi 0, %s325
          %p322 = scmp.ge.s32.totalorder %s321, 140
        $region39: #{_init_impl.3} parent=27 // loop_header_branch
          %324 = sbr.rel (%p322) target = $region43
        $region40: #{_init_impl.3} parent=27 // loop_body
          %s326 = smul.u32 %s321, 8
          %s327 = sshra.s32 %s326, 7
          %s328 = sand.u32 %s326, 127
          %s329 = smul.u32 %s327, 512
          %s330 = sshra.s32 %s326, 7
          %s331 = sand.u32 %s326, 127
          %s332 = sadd.s32 %s329, %s331
          %s333 = sld [smem:[#allocation2 + %s332]]
          %s334 = sadd.s32 128, %s331
          %s335 = sadd.s32 %s329, %s334
          %s336 = sld [smem:[#allocation2 + %s335]]
          %s337 = sadd.s32 256, %s331
          %s338 = sadd.s32 %s329, %s337
          %s339 = sld [smem:[#allocation2 + %s338]]
          %s340 = sadd.s32 384, %s331
          %s341 = sadd.s32 %s329, %s340
          %s342 = sld [smem:[#allocation2 + %s341]]
          %v343 = vstv %s336
          %v344 = vmul.f32 %v319, %v343
          %v345 = vround.ne.pseudo %v344
          %v346 = vstv %s339
          %v347 = vmax.f32 %v346, %v345
          %v348 = vstv %s342
          %v349 = vmin.f32 %v348, %v347
          %v350 = vstv %s333
          %v351 = vmul.f32 %v349, %v350
          %v352 = vsub.f32 %v319, %v351
          %v353 = vand.u32 2147483647, %v352
          %v354 = vlog2.pop %v353
          %v355 = vmul.f32 %v354, 0.6931472
          %v356 = vmul.f32 %v355, 2.4
          %v357 = vmul.f32 %v356, 1.442695
          %v358 = vpow.pop %v357
          %v359 = vrot.slane %v358, 4
          %v360 = vadd.f32 %v358, %v359
          %v361 = vrot.slane %v360, 2
          %v362 = vadd.f32 %v360, %v361
          %v363 = vrot.slane %v362, 1
          %v364 = vadd.f32 %v362, %v363
          %s365 = sadd.s32 %s326, 1
          %s366 = sshra.s32 %s365, 7
          %s367 = sand.u32 %s365, 127
          %s368 = smul.u32 %s366, 512
          %s369 = sshra.s32 %s365, 7
          %s370 = sand.u32 %s365, 127
          %s371 = sadd.s32 %s368, %s370
          %s372 = sld [smem:[#allocation2 + %s371]]
          %s373 = sadd.s32 128, %s370
          %s374 = sadd.s32 %s368, %s373
          %s375 = sld [smem:[#allocation2 + %s374]]
          %s376 = sadd.s32 256, %s370
          %s377 = sadd.s32 %s368, %s376
          %s378 = sld [smem:[#allocation2 + %s377]]
          %s379 = sadd.s32 384, %s370
          %s380 = sadd.s32 %s368, %s379
          %s381 = sld [smem:[#allocation2 + %s380]]
          %v382 = vstv %s375
          %v383 = vmul.f32 %v319, %v382
          %v384 = vround.ne.pseudo %v383
          %v385 = vstv %s378
          %v386 = vmax.f32 %v385, %v384
          %v387 = vstv %s381
          %v388 = vmin.f32 %v387, %v386
          %v389 = vstv %s372
          %v390 = vmul.f32 %v388, %v389
          %v391 = vsub.f32 %v319, %v390
          %v392 = vand.u32 2147483647, %v391
          %v393 = vlog2.pop %v392
          %v394 = vmul.f32 %v393, 0.6931472
          %v395 = vmul.f32 %v394, 2.4
          %v396 = vmul.f32 %v395, 1.442695
          %v397 = vpow.pop %v396
          %v398 = vrot.slane %v397, 4
          %v399 = vadd.f32 %v397, %v398
          %v400 = vrot.slane %v399, 2
          %v401 = vadd.f32 %v399, %v400
          %v402 = vrot.slane %v401, 1
          %v403 = vadd.f32 %v401, %v402
          %s404 = sadd.s32 %s326, 2
          %s405 = sshra.s32 %s404, 7
          %s406 = sand.u32 %s404, 127
          %s407 = smul.u32 %s405, 512
          %s408 = sshra.s32 %s404, 7
          %s409 = sand.u32 %s404, 127
          %s410 = sadd.s32 %s407, %s409
          %s411 = sld [smem:[#allocation2 + %s410]]
          %s412 = sadd.s32 128, %s409
          %s413 = sadd.s32 %s407, %s412
          %s414 = sld [smem:[#allocation2 + %s413]]
          %s415 = sadd.s32 256, %s409
          %s416 = sadd.s32 %s407, %s415
          %s417 = sld [smem:[#allocation2 + %s416]]
          %s418 = sadd.s32 384, %s409
          %s419 = sadd.s32 %s407, %s418
          %s420 = sld [smem:[#allocation2 + %s419]]
          %v421 = vstv %s414
          %v422 = vmul.f32 %v319, %v421
          %v423 = vround.ne.pseudo %v422
          %v424 = vstv %s417
          %v425 = vmax.f32 %v424, %v423
          %v426 = vstv %s420
          %v427 = vmin.f32 %v426, %v425
          %v428 = vstv %s411
          %v429 = vmul.f32 %v427, %v428
          %v430 = vsub.f32 %v319, %v429
          %v431 = vand.u32 2147483647, %v430
          %v432 = vlog2.pop %v431
          %v433 = vmul.f32 %v432, 0.6931472
          %v434 = vmul.f32 %v433, 2.4
          %v435 = vmul.f32 %v434, 1.442695
          %v436 = vpow.pop %v435
          %v437 = vrot.slane %v436, 4
          %v438 = vadd.f32 %v436, %v437
          %v439 = vrot.slane %v438, 2
          %v440 = vadd.f32 %v438, %v439
          %v441 = vrot.slane %v440, 1
          %v442 = vadd.f32 %v440, %v441
          %s443 = sadd.s32 %s326, 3
          %s444 = sshra.s32 %s443, 7
          %s445 = sand.u32 %s443, 127
          %s446 = smul.u32 %s444, 512
          %s447 = sshra.s32 %s443, 7
          %s448 = sand.u32 %s443, 127
          %s449 = sadd.s32 %s446, %s448
          %s450 = sld [smem:[#allocation2 + %s449]]
          %s451 = sadd.s32 128, %s448
          %s452 = sadd.s32 %s446, %s451
          %s453 = sld [smem:[#allocation2 + %s452]]
          %s454 = sadd.s32 256, %s448
          %s455 = sadd.s32 %s446, %s454
          %s456 = sld [smem:[#allocation2 + %s455]]
          %s457 = sadd.s32 384, %s448
          %s458 = sadd.s32 %s446, %s457
          %s459 = sld [smem:[#allocation2 + %s458]]
          %v460 = vstv %s453
          %v461 = vmul.f32 %v319, %v460
          %v462 = vround.ne.pseudo %v461
          %v463 = vstv %s456
          %v464 = vmax.f32 %v463, %v462
          %v465 = vstv %s459
          %v466 = vmin.f32 %v465, %v464
          %v467 = vstv %s450
          %v468 = vmul.f32 %v466, %v467
          %v469 = vsub.f32 %v319, %v468
          %v470 = vand.u32 2147483647, %v469
          %v471 = vlog2.pop %v470
          %v472 = vmul.f32 %v471, 0.6931472
          %v473 = vmul.f32 %v472, 2.4
          %v474 = vmul.f32 %v473, 1.442695
          %v475 = vpow.pop %v474
          %v476 = vrot.slane %v475, 4
          %v477 = vadd.f32 %v475, %v476
          %v478 = vrot.slane %v477, 2
          %v479 = vadd.f32 %v477, %v478
          %v480 = vrot.slane %v479, 1
          %v481 = vadd.f32 %v479, %v480
          %s482 = sadd.s32 %s326, 4
          %s483 = sshra.s32 %s482, 7
          %s484 = sand.u32 %s482, 127
          %s485 = smul.u32 %s483, 512
          %s486 = sshra.s32 %s482, 7
          %s487 = sand.u32 %s482, 127
          %s488 = sadd.s32 %s485, %s487
          %s489 = sld [smem:[#allocation2 + %s488]]
          %s490 = sadd.s32 128, %s487
          %s491 = sadd.s32 %s485, %s490
          %s492 = sld [smem:[#allocation2 + %s491]]
          %s493 = sadd.s32 256, %s487
          %s494 = sadd.s32 %s485, %s493
          %s495 = sld [smem:[#allocation2 + %s494]]
          %s496 = sadd.s32 384, %s487
          %s497 = sadd.s32 %s485, %s496
          %s498 = sld [smem:[#allocation2 + %s497]]
          %v499 = vstv %s492
          %v500 = vmul.f32 %v319, %v499
          %v501 = vround.ne.pseudo %v500
          %v502 = vstv %s495
          %v503 = vmax.f32 %v502, %v501
          %v504 = vstv %s498
          %v505 = vmin.f32 %v504, %v503
          %v506 = vstv %s489
          %v507 = vmul.f32 %v505, %v506
          %v508 = vsub.f32 %v319, %v507
          %v509 = vand.u32 2147483647, %v508
          %v510 = vlog2.pop %v509
          %v511 = vmul.f32 %v510, 0.6931472
          %v512 = vmul.f32 %v511, 2.4
          %v513 = vmul.f32 %v512, 1.442695
          %v514 = vpow.pop %v513
          %v515 = vrot.slane %v514, 4
          %v516 = vadd.f32 %v514, %v515
          %v517 = vrot.slane %v516, 2
          %v518 = vadd.f32 %v516, %v517
          %v519 = vrot.slane %v518, 1
          %v520 = vadd.f32 %v518, %v519
          %s521 = sadd.s32 %s326, 5
          %s522 = sshra.s32 %s521, 7
          %s523 = sand.u32 %s521, 127
          %s524 = smul.u32 %s522, 512
          %s525 = sshra.s32 %s521, 7
          %s526 = sand.u32 %s521, 127
          %s527 = sadd.s32 %s524, %s526
          %s528 = sld [smem:[#allocation2 + %s527]]
          %s529 = sadd.s32 128, %s526
          %s530 = sadd.s32 %s524, %s529
          %s531 = sld [smem:[#allocation2 + %s530]]
          %s532 = sadd.s32 256, %s526
          %s533 = sadd.s32 %s524, %s532
          %s534 = sld [smem:[#allocation2 + %s533]]
          %s535 = sadd.s32 384, %s526
          %s536 = sadd.s32 %s524, %s535
          %s537 = sld [smem:[#allocation2 + %s536]]
          %v538 = vstv %s531
          %v539 = vmul.f32 %v319, %v538
          %v540 = vround.ne.pseudo %v539
          %v541 = vstv %s534
          %v542 = vmax.f32 %v541, %v540
          %v543 = vstv %s537
          %v544 = vmin.f32 %v543, %v542
          %v545 = vstv %s528
          %v546 = vmul.f32 %v544, %v545
          %v547 = vsub.f32 %v319, %v546
          %v548 = vand.u32 2147483647, %v547
          %v549 = vlog2.pop %v548
          %v550 = vmul.f32 %v549, 0.6931472
          %v551 = vmul.f32 %v550, 2.4
          %v552 = vmul.f32 %v551, 1.442695
          %v553 = vpow.pop %v552
          %v554 = vrot.slane %v553, 4
          %v555 = vadd.f32 %v553, %v554
          %v556 = vrot.slane %v555, 2
          %v557 = vadd.f32 %v555, %v556
          %v558 = vrot.slane %v557, 1
          %v559 = vadd.f32 %v557, %v558
          %s560 = sadd.s32 %s326, 6
          %s561 = sshra.s32 %s560, 7
          %s562 = sand.u32 %s560, 127
          %s563 = smul.u32 %s561, 512
          %s564 = sshra.s32 %s560, 7
          %s565 = sand.u32 %s560, 127
          %s566 = sadd.s32 %s563, %s565
          %s567 = sld [smem:[#allocation2 + %s566]]
          %s568 = sadd.s32 128, %s565
          %s569 = sadd.s32 %s563, %s568
          %s570 = sld [smem:[#allocation2 + %s569]]
          %s571 = sadd.s32 256, %s565
          %s572 = sadd.s32 %s563, %s571
          %s573 = sld [smem:[#allocation2 + %s572]]
          %s574 = sadd.s32 384, %s565
          %s575 = sadd.s32 %s563, %s574
          %s576 = sld [smem:[#allocation2 + %s575]]
          %v577 = vstv %s570
          %v578 = vmul.f32 %v319, %v577
          %v579 = vround.ne.pseudo %v578
          %v580 = vstv %s573
          %v581 = vmax.f32 %v580, %v579
          %v582 = vstv %s576
          %v583 = vmin.f32 %v582, %v581
          %v584 = vstv %s567
          %v585 = vmul.f32 %v583, %v584
          %v586 = vsub.f32 %v319, %v585
          %v587 = vand.u32 2147483647, %v586
          %v588 = vlog2.pop %v587
          %v589 = vmul.f32 %v588, 0.6931472
          %v590 = vmul.f32 %v589, 2.4
          %v591 = vmul.f32 %v590, 1.442695
          %v592 = vpow.pop %v591
          %v593 = vrot.slane %v592, 4
          %v594 = vadd.f32 %v592, %v593
          %v595 = vrot.slane %v594, 2
          %v596 = vadd.f32 %v594, %v595
          %v597 = vrot.slane %v596, 1
          %v598 = vadd.f32 %v596, %v597
          %s599 = sadd.s32 %s326, 7
          %s600 = sshra.s32 %s599, 7
          %s601 = sand.u32 %s599, 127
          %s602 = smul.u32 %s600, 512
          %s603 = sshra.s32 %s599, 7
          %s604 = sand.u32 %s599, 127
          %s605 = sadd.s32 %s602, %s604
          %s606 = sld [smem:[#allocation2 + %s605]]
          %s607 = sadd.s32 128, %s604
          %s608 = sadd.s32 %s602, %s607
          %s609 = sld [smem:[#allocation2 + %s608]]
          %s610 = sadd.s32 256, %s604
          %s611 = sadd.s32 %s602, %s610
          %s612 = sld [smem:[#allocation2 + %s611]]
          %s613 = sadd.s32 384, %s604
          %s614 = sadd.s32 %s602, %s613
          %s615 = sld [smem:[#allocation2 + %s614]]
          %v616 = vstv %s609
          %v617 = vmul.f32 %v319, %v616
          %v618 = vround.ne.pseudo %v617
          %v619 = vstv %s612
          %v620 = vmax.f32 %v619, %v618
          %v621 = vstv %s615
          %v622 = vmin.f32 %v621, %v620
          %v623 = vstv %s606
          %v624 = vmul.f32 %v622, %v623
          %v625 = vsub.f32 %v319, %v624
          %v626 = vand.u32 2147483647, %v625
          %v627 = vlog2.pop %v626
          %v628 = vmul.f32 %v627, 0.6931472
          %v629 = vmul.f32 %v628, 2.4
          %v630 = vmul.f32 %v629, 1.442695
          %v631 = vpow.pop %v630
          %v632 = vrot.slane %v631, 4
          %v633 = vadd.f32 %v631, %v632
          %v634 = vrot.slane %v633, 2
          %v635 = vadd.f32 %v633, %v634
          %v636 = vrot.slane %v635, 1
          %v637 = vadd.f32 %v635, %v636
          %vm638 = vcmask 1040384
          %v639 = vsel %vm638, %v364, %v403
          %vm640 = vcmask 1041408
          %v641 = vsel %vm640, %v639, %v442
          %vm642 = vcmask 1042432
          %v643 = vsel %vm642, %v641, %v481
          %vm644 = vcmask 1043456
          %v645 = vsel %vm644, %v643, %v520
          %vm646 = vcmask 1044480
          %v647 = vsel %vm646, %v645, %v559
          %vm648 = vcmask 1045504
          %v649 = vsel %vm648, %v647, %v598
          %vm650 = vcmask 1046528
          %v651 = vsel %vm650, %v649, %v637
          %s652 = scalar_lea.vmem %s173, %s326
          %v653 = vld [vmem:[%s652] sm:$0xff]
          %v654 = vadd.f32 %v653, %v651
          %655 = vst [vmem:[%s652] sm:$0xff] %v654
        $region41: #{_init_impl.3} parent=27 // loop_footer
          %s325 = sadd.s32 1, %s321
        $region42: #{_init_impl.3} parent=27 // loop_footer_branch
          %320 = sbr.rel target = $region38
        $region43: #{_init_impl.3} parent=27 // loop_exit
          _
        %s656 = smul.u32 140, %s18
        %p657 = scmp.lt.s32.totalorder %s656, 279
        %s658 = scalar_select %p657, %s656, 279
        %s659 = smul.addr %s658, 8
        %s660 = scalar_lea.vmem %s2, %s659
        // Predicated region
        $region44: #{_init_impl.3} parent=27 // pred_check
          %p661 = pneg %p93
        $region45: #{_init_impl.3} parent=27 // pred_check_branch
          %663 = sbr.rel (%p661) target = $region47
        $region46: #{_init_impl.3} parent=27 // pred_region
          %s664 = smul.u32 140, %s18
        $region47: #{_init_impl.3} parent=27 // pred_fallthru
          _
      $region28: #{_init_impl.3} parent=5 // pred_fallthru
        _
      %p665 = scmp.le.s32.totalorder 2, %s9
      // Predicated region
      $region48: #{_init_impl.3} parent=5 // pred_check
        %p666 = pneg %p665
      $region49: #{_init_impl.3} parent=5 // pred_check_branch
        %668 = sbr.rel (%p666) target = $region51
      $region50: #{_init_impl.3} parent=5 // pred_region
        %s669 = ssub.s32 %s9, 2
        // Predicated region
        $region52: #{_init_impl.3} parent=50 // pred_check
          %p670 = pneg %p99
        $region53: #{_init_impl.3} parent=50 // pred_check_branch
          %672 = sbr.rel (%p670) target = $region55
        $region54: #{_init_impl.3} parent=50 // pred_region
          %s673 = smul.u32 140, %s20
          %p674 = scmp.lt.s32.totalorder %s673, 279
          %s675 = scalar_select %p674, %s673, 279
          %s676 = smul.addr %s675, 8
          %s677 = scalar_lea.vmem %s2, %s676
        $region55: #{_init_impl.3} parent=50 // pred_fallthru
          _
      $region51: #{_init_impl.3} parent=5 // pred_fallthru
        _
    $region6: #{_init_impl.3} parent=1 // loop_footer
      %s13 = sadd.s32 1, %s9
    $region7: #{_init_impl.3} parent=1 // loop_footer_branch
      %8 = sbr.rel target = $region3
    $region8: #{_init_impl.3} parent=1 // loop_exit
      _
    %678 = vsyncpa [#allocation3], 1
    %s679 = scalar_lea.sflag [#allocation3], 1
    %680 = vsyncpa %s679, 1

</llo_original>
